<compile_context>
chip_gen: v6e
topology: v6e:2x2x1
jax: 0.10.0
libtpu: 0.0.40
codegen_flags: <defaults>
</compile_context>

<pallas_src>
import functools

import jax
import jax.numpy as jnp
from jax.experimental import pallas as pl
from jax.experimental.pallas import tpu as pltpu

LANES = 128     # TPU lane width; all channel/class dims are zero-padded to this.
KSIZE = 5       # conv kernel size (fixed by the PyTorch module)


# ----------------------------- Pallas kernels ------------------------------

def conv_pool_relu_kernel(p_ref, w_ref, b_ref, o_ref):
    """Fused conv-as-matmul + bias + 2x2 max-pool + ReLU.

    p_ref: (4, TM, K) bf16   im2col patches; leading axis = pool-window corner
    w_ref: (K, 128)   bf16   flattened conv weight, Cout zero-padded to 128 lanes
    b_ref: (1, 128)   f32    bias (zero-padded)
    o_ref: (TM, 128)  bf16   pooled + ReLU'd activations, channels-last
    """
    w = w_ref[...]
    y = jnp.dot(p_ref[0], w, preferred_element_type=jnp.float32)
    for c in range(1, 4):
        y = jnp.maximum(y, jnp.dot(p_ref[c], w, preferred_element_type=jnp.float32))
    y = jnp.maximum(y + b_ref[...], 0.0)          # max-pool commutes with +bias
    o_ref[...] = y.astype(o_ref.dtype)


def fc_tail_kernel(x_ref, w1_ref, b1_ref, w2_ref, b2_ref, o_ref, *, num_classes):
    """Fused fc1 + ReLU + fc2 + row-wise log_softmax (padded class lanes masked)."""
    h = jnp.dot(x_ref[...], w1_ref[...], preferred_element_type=jnp.float32)
    h = jnp.maximum(h + b1_ref[...], 0.0)
    y = jnp.dot(h.astype(w2_ref.dtype), w2_ref[...],
                preferred_element_type=jnp.float32) + b2_ref[...]
    col = jax.lax.broadcasted_iota(jnp.int32, y.shape, 1)
    y = jnp.where(col < num_classes, y, -1e30)    # mask zero-padded class lanes
    m = jnp.max(y, axis=-1, keepdims=True)
    z = y - m
    lse = jnp.log(jnp.sum(jnp.exp(z), axis=-1, keepdims=True))
    o_ref[...] = (z - lse).astype(o_ref.dtype)


# ------------------------------ Pallas wrappers ----------------------------

def _row_tile(total, target):
    """Largest multiple-of-8 divisor of `total` that is <= target (else `total`)."""
    if total <= target:
        return total
    best = total
    for t in range(8, target + 1, 8):
        if total % t == 0:
            best = t
    return best


def conv_pool_relu(patches, w, b, *, row_tile_target=256):
    """patches: (4, R, K) bf16, w: (K, 128) bf16, b: (1, 128) f32 -> (R, 128) bf16."""
    _, R, K = patches.shape
    tm = _row_tile(R, row_tile_target)
    return pl.pallas_call(
        conv_pool_relu_kernel,
        out_shape=jax.ShapeDtypeStruct((R, LANES), jnp.bfloat16),
        grid_spec=pltpu.PrefetchScalarGridSpec(
            num_scalar_prefetch=0,
            grid=(R // tm,),
            in_specs=[
                pl.BlockSpec((4, tm, K), lambda i: (0, i, 0)),
                pl.BlockSpec((K, LANES), lambda i: (0, 0)),
                pl.BlockSpec((1, LANES), lambda i: (0, 0)),
            ],
            out_specs=pl.BlockSpec((tm, LANES), lambda i: (i, 0)),
        ),
        compiler_params=pltpu.CompilerParams(
            dimension_semantics=("parallel",)),     # lets v7x shard rows over 2 TCs
    )(patches, w, b)


def fc_tail(x, w1, b1, w2, b2, num_classes):
    """x: (N, K) bf16 -> (N, 128) f32 log-probs (real classes in lanes [0, num_classes))."""
    N, K = x.shape
    kern = functools.partial(fc_tail_kernel, num_classes=num_classes)
    return pl.pallas_call(
        kern,
        out_shape=jax.ShapeDtypeStruct((N, LANES), jnp.float32),
        in_specs=[
            pl.BlockSpec((N, K), lambda: (0, 0)),
            pl.BlockSpec((K, LANES), lambda: (0, 0)),
            pl.BlockSpec((1, LANES), lambda: (0, 0)),
            pl.BlockSpec((LANES, LANES), lambda: (0, 0)),
            pl.BlockSpec((1, LANES), lambda: (0, 0)),
        ],
        out_specs=pl.BlockSpec((N, LANES), lambda: (0, 0)),
    )(x, w1, b1, w2, b2)


# ------------------------- im2col glue (channels-last) ---------------------

def pooled_patches(x_nhwc, k):
    """NHWC -> im2col patches grouped by 2x2 pool-window corner.

    Returns p of shape (4, N*Hp*Wp, k*k*C): axis 0 is the pool corner (ph*2+pw),
    rows are (n, hp, wp) row-major, columns are flattened in (kh, kw, c) order.
    """
    N, H, W, C = x_nhwc.shape
    Ho, Wo = H - k + 1, W - k + 1
    Hp, Wp = Ho // 2, Wo // 2
    wins = [x_nhwc[:, kh:kh + Ho, kw:kw + Wo, :] for kh in range(k) for kw in range(k)]
    p = jnp.stack(wins, axis=3)                      # (N, Ho, Wo, k*k, C)
    p = p.reshape(N, Hp, 2, Wp, 2, k * k, C)         # split ho=(hp,ph), wo=(wp,pw)
    p = p.transpose(2, 4, 0, 1, 3, 5, 6)             # (ph, pw, n, hp, wp, kk, c)
    return p.reshape(4, N * Hp * Wp, k * k * C), (Hp, Wp)


# ------------------------------- parameters --------------------------------

def init_torch_style_params(key, num_channels=1, num_classes=10):
    """Random parameters in native PyTorch shapes/conventions."""
    ks = jax.random.split(key, 8)
    return {
        "conv1_w": jax.random.normal(ks[0], (10, num_channels, KSIZE, KSIZE), jnp.float32) * 0.1,
        "conv1_b": jax.random.normal(ks[1], (10,), jnp.float32) * 0.05,
        "conv2_w": jax.random.normal(ks[2], (20, 10, KSIZE, KSIZE), jnp.float32) * 0.05,
        "conv2_b": jax.random.normal(ks[3], (20,), jnp.float32) * 0.05,
        "fc1_w":  jax.random.normal(ks[4], (50, 320), jnp.float32) * 0.05,   # (out, in)
        "fc1_b":  jax.random.normal(ks[5], (50,), jnp.float32) * 0.05,
        "fc2_w":  jax.random.normal(ks[6], (num_classes, 50), jnp.float32) * 0.1,
        "fc2_b":  jax.random.normal(ks[7], (num_classes,), jnp.float32) * 0.05,
    }


def prepare_params(raw, num_classes):
    """One-time offline repack: flatten conv/fc weights to matmul layout,
    zero-pad every output dim to 128 lanes, cast matmul operands to bf16."""
    def conv_w(w):                                   # (Cout, Cin, k, k) -> (k*k*Cin, 128)
        cout = w.shape[0]
        wt = jnp.transpose(w, (2, 3, 1, 0)).reshape(-1, cout)   # rows in (kh, kw, ci) order
        return jnp.pad(wt, ((0, 0), (0, LANES - cout))).astype(jnp.bfloat16)

    def pad_bias(b):
        return jnp.pad(b, (0, LANES - b.shape[0])).reshape(1, LANES).astype(jnp.float32)

    c2 = raw["conv2_w"].shape[0]                     # 20
    out_f, in_f = raw["fc1_w"].shape                 # (50, 320)
    s = int(round((in_f // c2) ** 0.5))              # 4 (pooled spatial size)
    # fc1 weight: PyTorch flattens features as (c, h, w); our activations are (h, w, c).
    wf1 = raw["fc1_w"].reshape(out_f, c2, s, s).transpose(0, 2, 3, 1).reshape(out_f, in_f).T
    wf1 = jnp.pad(wf1, ((0, 0), (0, LANES - out_f))).astype(jnp.bfloat16)            # (320, 128)
    wf2 = jnp.pad(raw["fc2_w"].T,
                  ((0, LANES - out_f), (0, LANES - num_classes))).astype(jnp.bfloat16)  # (128, 128)
    return {
        "w1": conv_w(raw["conv1_w"]), "b1": pad_bias(raw["conv1_b"]),
        "w2": conv_w(raw["conv2_w"]), "b2": pad_bias(raw["conv2_b"]),
        "wf1": wf1, "bf1": pad_bias(raw["fc1_b"]),
        "wf2": wf2, "bf2": pad_bias(raw["fc2_b"]),
    }


# ------------------------------- full forward ------------------------------

@functools.partial(jax.jit, static_argnames=("c1", "c2", "num_classes"))
def cnn_mnist_forward(x, params, *, c1, c2, num_classes):
    """x: (N, Cin, H, W) NCHW float32, PyTorch convention."""
    N = x.shape[0]
    xn = jnp.transpose(x, (0, 2, 3, 1)).astype(jnp.bfloat16)     # NHWC, bf16 for the MXU

    # stage 1: conv1 -> 2x2 max-pool -> ReLU, fused in one kernel
    p1, (hp1, wp1) = pooled_patches(xn, KSIZE)
    a1 = conv_pool_relu(p1, params["w1"], params["b1"])          # (N*12*12, 128) bf16

    # stage 2: conv2 -> (Dropout2d = identity in eval) -> 2x2 max-pool -> ReLU
    x1 = a1[:, :c1].reshape(N, hp1, wp1, c1)                     # channels-last, real channels
    p2, (hp2, wp2) = pooled_patches(x1, KSIZE)
    a2 = conv_pool_relu(p2, params["w2"], params["b2"])          # (N*4*4, 128) bf16

    # fused tail: flatten -> fc1 -> ReLU -> (dropout = identity) -> fc2 -> log_softmax
    xf = a2[:, :c2].reshape(N, hp2 * wp2 * c2)                   # features in (h, w, c) order
    logp = fc_tail(xf, params["wf1"], params["bf1"],
                   params["wf2"], params["bf2"], num_classes)    # (N, 128) f32
    return logp[:, :num_classes]


# ------------------------- plain-JAX reference (f32) -----------------------

def reference_forward(x, raw):
    def conv(y, w, b):
        y = jax.lax.conv_general_dilated(y, w, (1, 1), "VALID",
                                         dimension_numbers=("NCHW", "OIHW", "NCHW"))
        return y + b[None, :, None, None]

    def pool_relu(y):
        n, c, h, w = y.shape
        y = y.reshape(n, c, h // 2, 2, w // 2, 2).max(axis=(3, 5))
        return jnp.maximum(y, 0.0)

    y = pool_relu(conv(x, raw["conv1_w"], raw["conv1_b"]))
    y = pool_relu(conv(y, raw["conv2_w"], raw["conv2_b"]))
    y = y.reshape(y.shape[0], -1)                                # PyTorch (c, h, w) flatten
    y = jnp.maximum(y @ raw["fc1_w"].T + raw["fc1_b"], 0.0)
    y = y @ raw["fc2_w"].T + raw["fc2_b"]
    return jax.nn.log_softmax(y, axis=-1)


if __name__ == "__main__":
    key = jax.random.PRNGKey(0)
    k_params, k_x = jax.random.split(key)

    # MNIST geometry (fc1 expects 320 = 20*4*4 => 28x28 spatial, 1 channel).
    batch, num_channels, num_classes = 2, 1, 10
    x = jax.random.normal(k_x, (batch, num_channels, 28, 28), jnp.float32)

    raw = init_torch_style_params(k_params, num_channels, num_classes)
    params = prepare_params(raw, num_classes)

    out = cnn_mnist_forward(x, params,
                            c1=raw["conv1_w"].shape[0],
                            c2=raw["conv2_w"].shape[0],
                            num_classes=num_classes)
    out = jax.block_until_ready(out)

    assert out.shape == (batch, num_classes), out.shape
    assert bool(jnp.all(jnp.isfinite(out)))
    # rows of log_softmax should exp-sum to 1
    assert bool(jnp.allclose(jnp.sum(jnp.exp(out), axis=1), 1.0, atol=1e-4))

    # check against the plain-JAX f32 reference (bf16 matmuls => loose tolerance)
    ref = reference_forward(x, raw)
    max_err = float(jnp.max(jnp.abs(out - ref)))
    assert max_err < 0.1, f"mismatch vs reference: {max_err}"

    print("KERNEL_OK")
</pallas_src>

<mosaic_0001>
module attributes {stable_mosaic.version = 11 : i64} {
  func.func @conv_pool_relu_kernel(%arg0: i32, %arg1: memref<4x144x25xbf16, #tpu.memory_space<vmem>>, %arg2: memref<25x128xbf16, #tpu.memory_space<vmem>>, %arg3: memref<1x128xf32, #tpu.memory_space<vmem>>, %arg4: memref<144x128xbf16, #tpu.memory_space<vmem>>) attributes {dimension_semantics = [#tpu.dimension_semantics<parallel>], iteration_bounds = array<i64: 2>, scalar_prefetch = 0 : i64, scratch_operands = 0 : i64, tpu.core_type = #tpu.core_type<tc>, window_params = [{transform_indices = @transform_0, window_bounds = array<i64: 4, 144, 25>}, {pipeline_mode = #tpu.pipeline_mode<synchronous>, transform_indices = @transform_1, window_bounds = array<i64: 25, 128>}, {pipeline_mode = #tpu.pipeline_mode<synchronous>, transform_indices = @transform_2, window_bounds = array<i64: 1, 128>}, {transform_indices = @transform_3, window_bounds = array<i64: 144, 128>}]} {
    %c0 = arith.constant 0 : index
    %c0_0 = arith.constant 0 : index
    %0 = vector.load %arg2[%c0, %c0_0] : memref<25x128xbf16, #tpu.memory_space<vmem>>, vector<25x128xbf16>
    %c0_1 = arith.constant 0 : index
    %c0_2 = arith.constant 0 : index
    %c0_3 = arith.constant 0 : index
    %1 = vector.load %arg1[%c0_1, %c0_2, %c0_3] : memref<4x144x25xbf16, #tpu.memory_space<vmem>>, vector<1x144x25xbf16>
    %2 = vector.shape_cast %1 : vector<1x144x25xbf16> to vector<144x25xbf16>
    %cst = arith.constant dense<0.000000e+00> : vector<144x128xf32>
    %3 = tpu.matmul %2, %0, %cst {dimension_numbers = #tpu.dot_dimension_numbers<[1], [0], [0], [1], [0, 0, 1, 1], [], []>} : vector<144x25xbf16>, vector<25x128xbf16>, vector<144x128xf32> -> vector<144x128xf32>
    %c1 = arith.constant 1 : index
    %c0_4 = arith.constant 0 : index
    %c0_5 = arith.constant 0 : index
    %4 = vector.load %arg1[%c1, %c0_4, %c0_5] : memref<4x144x25xbf16, #tpu.memory_space<vmem>>, vector<1x144x25xbf16>
    %5 = vector.shape_cast %4 : vector<1x144x25xbf16> to vector<144x25xbf16>
    %cst_6 = arith.constant dense<0.000000e+00> : vector<144x128xf32>
    %6 = tpu.matmul %5, %0, %cst_6 {dimension_numbers = #tpu.dot_dimension_numbers<[1], [0], [0], [1], [0, 0, 1, 1], [], []>} : vector<144x25xbf16>, vector<25x128xbf16>, vector<144x128xf32> -> vector<144x128xf32>
    %7 = arith.maximumf %3, %6 : vector<144x128xf32>
    %c2 = arith.constant 2 : index
    %c0_7 = arith.constant 0 : index
    %c0_8 = arith.constant 0 : index
    %8 = vector.load %arg1[%c2, %c0_7, %c0_8] : memref<4x144x25xbf16, #tpu.memory_space<vmem>>, vector<1x144x25xbf16>
    %9 = vector.shape_cast %8 : vector<1x144x25xbf16> to vector<144x25xbf16>
    %cst_9 = arith.constant dense<0.000000e+00> : vector<144x128xf32>
    %10 = tpu.matmul %9, %0, %cst_9 {dimension_numbers = #tpu.dot_dimension_numbers<[1], [0], [0], [1], [0, 0, 1, 1], [], []>} : vector<144x25xbf16>, vector<25x128xbf16>, vector<144x128xf32> -> vector<144x128xf32>
    %11 = arith.maximumf %7, %10 : vector<144x128xf32>
    %c3 = arith.constant 3 : index
    %c0_10 = arith.constant 0 : index
    %c0_11 = arith.constant 0 : index
    %12 = vector.load %arg1[%c3, %c0_10, %c0_11] : memref<4x144x25xbf16, #tpu.memory_space<vmem>>, vector<1x144x25xbf16>
    %13 = vector.shape_cast %12 : vector<1x144x25xbf16> to vector<144x25xbf16>
    %cst_12 = arith.constant dense<0.000000e+00> : vector<144x128xf32>
    %14 = tpu.matmul %13, %0, %cst_12 {dimension_numbers = #tpu.dot_dimension_numbers<[1], [0], [0], [1], [0, 0, 1, 1], [], []>} : vector<144x25xbf16>, vector<25x128xbf16>, vector<144x128xf32> -> vector<144x128xf32>
    %15 = arith.maximumf %11, %14 : vector<144x128xf32>
    %c0_13 = arith.constant 0 : index
    %c0_14 = arith.constant 0 : index
    %16 = vector.load %arg3[%c0_13, %c0_14] : memref<1x128xf32, #tpu.memory_space<vmem>>, vector<1x128xf32>
    %17 = vector.broadcast %16 : vector<1x128xf32> to vector<144x128xf32>
    %18 = arith.addf %15, %17 : vector<144x128xf32>
    %cst_15 = arith.constant 0.000000e+00 : f32
    %19 = vector.broadcast %cst_15 : f32 to vector<144x128xf32>
    %20 = arith.maximumf %18, %19 : vector<144x128xf32>
    %21 = arith.truncf %20 : vector<144x128xf32> to vector<144x128xbf16>
    %c0_16 = arith.constant 0 : index
    %c0_17 = arith.constant 0 : index
    %22 = vector.load %arg4[%c0_16, %c0_17] : memref<144x128xbf16, #tpu.memory_space<vmem>>, vector<144x128xbf16>
    tpu.vector_store %arg4[%c0_16, %c0_17], %21 {strides = array<i32>} : memref<144x128xbf16, #tpu.memory_space<vmem>>, vector<144x128xbf16>,
    return
  }
  func.func @transform_0(%arg0: i32) -> (i32, i32, i32) {
    %c0_i32 = arith.constant 0 : i32
    %c0_i32_0 = arith.constant 0 : i32
    %c0_i32_1 = arith.constant 0 : i32
    return %c0_i32, %arg0, %c0_i32_0 : i32, i32, i32
  }
  func.func @transform_1(%arg0: i32) -> (i32, i32) {
    %c0_i32 = arith.constant 0 : i32
    %c0_i32_0 = arith.constant 0 : i32
    %c0_i32_1 = arith.constant 0 : i32
    return %c0_i32, %c0_i32_0 : i32, i32
  }
  func.func @transform_2(%arg0: i32) -> (i32, i32) {
    %c0_i32 = arith.constant 0 : i32
    %c0_i32_0 = arith.constant 0 : i32
    %c0_i32_1 = arith.constant 0 : i32
    return %c0_i32, %c0_i32_0 : i32, i32
  }
  func.func @transform_3(%arg0: i32) -> (i32, i32) {
    %c0_i32 = arith.constant 0 : i32
    %c0_i32_0 = arith.constant 0 : i32
    return %arg0, %c0_i32 : i32, i32
  }
}

module attributes {stable_mosaic.version = 11 : i64} {
  func.func @conv_pool_relu_kernel(%arg0: i32, %arg1: memref<4x32x250xbf16, #tpu.memory_space<vmem>>, %arg2: memref<250x128xbf16, #tpu.memory_space<vmem>>, %arg3: memref<1x128xf32, #tpu.memory_space<vmem>>, %arg4: memref<32x128xbf16, #tpu.memory_space<vmem>>) attributes {dimension_semantics = [#tpu.dimension_semantics<parallel>], iteration_bounds = array<i64: 1>, scalar_prefetch = 0 : i64, scratch_operands = 0 : i64, tpu.core_type = #tpu.core_type<tc>, window_params = [{transform_indices = @transform_0, window_bounds = array<i64: 4, 32, 250>}, {pipeline_mode = #tpu.pipeline_mode<synchronous>, transform_indices = @transform_1, window_bounds = array<i64: 250, 128>}, {pipeline_mode = #tpu.pipeline_mode<synchronous>, transform_indices = @transform_2, window_bounds = array<i64: 1, 128>}, {transform_indices = @transform_3, window_bounds = array<i64: 32, 128>}]} {
    %c0 = arith.constant 0 : index
    %c0_0 = arith.constant 0 : index
    %0 = vector.load %arg2[%c0, %c0_0] : memref<250x128xbf16, #tpu.memory_space<vmem>>, vector<250x128xbf16>
    %c0_1 = arith.constant 0 : index
    %c0_2 = arith.constant 0 : index
    %c0_3 = arith.constant 0 : index
    %1 = vector.load %arg1[%c0_1, %c0_2, %c0_3] : memref<4x32x250xbf16, #tpu.memory_space<vmem>>, vector<1x32x250xbf16>
    %2 = vector.shape_cast %1 : vector<1x32x250xbf16> to vector<32x250xbf16>
    %cst = arith.constant dense<0.000000e+00> : vector<32x128xf32>
    %3 = tpu.matmul %2, %0, %cst {dimension_numbers = #tpu.dot_dimension_numbers<[1], [0], [0], [1], [0, 0, 1, 1], [], []>} : vector<32x250xbf16>, vector<250x128xbf16>, vector<32x128xf32> -> vector<32x128xf32>
    %c1 = arith.constant 1 : index
    %c0_4 = arith.constant 0 : index
    %c0_5 = arith.constant 0 : index
    %4 = vector.load %arg1[%c1, %c0_4, %c0_5] : memref<4x32x250xbf16, #tpu.memory_space<vmem>>, vector<1x32x250xbf16>
    %5 = vector.shape_cast %4 : vector<1x32x250xbf16> to vector<32x250xbf16>
    %cst_6 = arith.constant dense<0.000000e+00> : vector<32x128xf32>
    %6 = tpu.matmul %5, %0, %cst_6 {dimension_numbers = #tpu.dot_dimension_numbers<[1], [0], [0], [1], [0, 0, 1, 1], [], []>} : vector<32x250xbf16>, vector<250x128xbf16>, vector<32x128xf32> -> vector<32x128xf32>
    %7 = arith.maximumf %3, %6 : vector<32x128xf32>
    %c2 = arith.constant 2 : index
    %c0_7 = arith.constant 0 : index
    %c0_8 = arith.constant 0 : index
    %8 = vector.load %arg1[%c2, %c0_7, %c0_8] : memref<4x32x250xbf16, #tpu.memory_space<vmem>>, vector<1x32x250xbf16>
    %9 = vector.shape_cast %8 : vector<1x32x250xbf16> to vector<32x250xbf16>
    %cst_9 = arith.constant dense<0.000000e+00> : vector<32x128xf32>
    %10 = tpu.matmul %9, %0, %cst_9 {dimension_numbers = #tpu.dot_dimension_numbers<[1], [0], [0], [1], [0, 0, 1, 1], [], []>} : vector<32x250xbf16>, vector<250x128xbf16>, vector<32x128xf32> -> vector<32x128xf32>
    %11 = arith.maximumf %7, %10 : vector<32x128xf32>
    %c3 = arith.constant 3 : index
    %c0_10 = arith.constant 0 : index
    %c0_11 = arith.constant 0 : index
    %12 = vector.load %arg1[%c3, %c0_10, %c0_11] : memref<4x32x250xbf16, #tpu.memory_space<vmem>>, vector<1x32x250xbf16>
    %13 = vector.shape_cast %12 : vector<1x32x250xbf16> to vector<32x250xbf16>
    %cst_12 = arith.constant dense<0.000000e+00> : vector<32x128xf32>
    %14 = tpu.matmul %13, %0, %cst_12 {dimension_numbers = #tpu.dot_dimension_numbers<[1], [0], [0], [1], [0, 0, 1, 1], [], []>} : vector<32x250xbf16>, vector<250x128xbf16>, vector<32x128xf32> -> vector<32x128xf32>
    %15 = arith.maximumf %11, %14 : vector<32x128xf32>
    %c0_13 = arith.constant 0 : index
    %c0_14 = arith.constant 0 : index
    %16 = vector.load %arg3[%c0_13, %c0_14] : memref<1x128xf32, #tpu.memory_space<vmem>>, vector<1x128xf32>
    %17 = vector.broadcast %16 : vector<1x128xf32> to vector<32x128xf32>
    %18 = arith.addf %15, %17 : vector<32x128xf32>
    %cst_15 = arith.constant 0.000000e+00 : f32
    %19 = vector.broadcast %cst_15 : f32 to vector<32x128xf32>
    %20 = arith.maximumf %18, %19 : vector<32x128xf32>
    %21 = arith.truncf %20 : vector<32x128xf32> to vector<32x128xbf16>
    %c0_16 = arith.constant 0 : index
    %c0_17 = arith.constant 0 : index
    %22 = vector.load %arg4[%c0_16, %c0_17] : memref<32x128xbf16, #tpu.memory_space<vmem>>, vector<32x128xbf16>
    tpu.vector_store %arg4[%c0_16, %c0_17], %21 {strides = array<i32>} : memref<32x128xbf16, #tpu.memory_space<vmem>>, vector<32x128xbf16>,
    return
  }
  func.func @transform_0(%arg0: i32) -> (i32, i32, i32) {
    %c0_i32 = arith.constant 0 : i32
    %c0_i32_0 = arith.constant 0 : i32
    %c0_i32_1 = arith.constant 0 : i32
    return %c0_i32, %arg0, %c0_i32_0 : i32, i32, i32
  }
  func.func @transform_1(%arg0: i32) -> (i32, i32) {
    %c0_i32 = arith.constant 0 : i32
    %c0_i32_0 = arith.constant 0 : i32
    %c0_i32_1 = arith.constant 0 : i32
    return %c0_i32, %c0_i32_0 : i32, i32
  }
  func.func @transform_2(%arg0: i32) -> (i32, i32) {
    %c0_i32 = arith.constant 0 : i32
    %c0_i32_0 = arith.constant 0 : i32
    %c0_i32_1 = arith.constant 0 : i32
    return %c0_i32, %c0_i32_0 : i32, i32
  }
  func.func @transform_3(%arg0: i32) -> (i32, i32) {
    %c0_i32 = arith.constant 0 : i32
    %c0_i32_0 = arith.constant 0 : i32
    return %arg0, %c0_i32 : i32, i32
  }
}

module attributes {stable_mosaic.version = 11 : i64} {
  func.func @fc_tail_kernel(%arg0: memref<2x320xbf16, #tpu.memory_space<vmem>>, %arg1: memref<320x128xbf16, #tpu.memory_space<vmem>>, %arg2: memref<1x128xf32, #tpu.memory_space<vmem>>, %arg3: memref<128x128xbf16, #tpu.memory_space<vmem>>, %arg4: memref<1x128xf32, #tpu.memory_space<vmem>>, %arg5: memref<2x128xf32, #tpu.memory_space<vmem>>) attributes {dimension_semantics = [], scalar_prefetch = 0 : i64, scratch_operands = 0 : i64, tpu.core_type = #tpu.core_type<tc>} {
    %c0 = arith.constant 0 : index
    %c0_0 = arith.constant 0 : index
    %0 = vector.load %arg0[%c0, %c0_0] : memref<2x320xbf16, #tpu.memory_space<vmem>>, vector<2x320xbf16>
    %c0_1 = arith.constant 0 : index
    %c0_2 = arith.constant 0 : index
    %1 = vector.load %arg1[%c0_1, %c0_2] : memref<320x128xbf16, #tpu.memory_space<vmem>>, vector<320x128xbf16>
    %cst = arith.constant dense<0.000000e+00> : vector<2x128xf32>
    %2 = tpu.matmul %0, %1, %cst {dimension_numbers = #tpu.dot_dimension_numbers<[1], [0], [0], [1], [0, 0, 1, 1], [], []>} : vector<2x320xbf16>, vector<320x128xbf16>, vector<2x128xf32> -> vector<2x128xf32>
    %c0_3 = arith.constant 0 : index
    %c0_4 = arith.constant 0 : index
    %3 = vector.load %arg2[%c0_3, %c0_4] : memref<1x128xf32, #tpu.memory_space<vmem>>, vector<1x128xf32>
    %4 = vector.broadcast %3 : vector<1x128xf32> to vector<2x128xf32>
    %5 = arith.addf %2, %4 : vector<2x128xf32>
    %cst_5 = arith.constant 0.000000e+00 : f32
    %6 = vector.broadcast %cst_5 : f32 to vector<2x128xf32>
    %7 = arith.maximumf %5, %6 : vector<2x128xf32>
    %8 = arith.truncf %7 : vector<2x128xf32> to vector<2x128xbf16>
    %c0_6 = arith.constant 0 : index
    %c0_7 = arith.constant 0 : index
    %9 = vector.load %arg3[%c0_6, %c0_7] : memref<128x128xbf16, #tpu.memory_space<vmem>>, vector<128x128xbf16>
    %cst_8 = arith.constant dense<0.000000e+00> : vector<2x128xf32>
    %10 = tpu.matmul %8, %9, %cst_8 {dimension_numbers = #tpu.dot_dimension_numbers<[1], [0], [0], [1], [0, 0, 1, 1], [], []>} : vector<2x128xbf16>, vector<128x128xbf16>, vector<2x128xf32> -> vector<2x128xf32>
    %c0_9 = arith.constant 0 : index
    %c0_10 = arith.constant 0 : index
    %11 = vector.load %arg4[%c0_9, %c0_10] : memref<1x128xf32, #tpu.memory_space<vmem>>, vector<1x128xf32>
    %12 = vector.broadcast %11 : vector<1x128xf32> to vector<2x128xf32>
    %13 = arith.addf %10, %12 : vector<2x128xf32>
    %14 = tpu.iota {dimensions = array<i32: 1>} : vector<2x128xi32>
    %c10_i32 = arith.constant 10 : i32
    %15 = vector.broadcast %c10_i32 : i32 to vector<2x128xi32>
    %16 = arith.cmpi slt, %14, %15 : vector<2x128xi32>
    %cst_11 = arith.constant -1.000000e+30 : f32
    %17 = vector.broadcast %cst_11 : f32 to vector<2x128xf32>
    %18 = arith.select %16, %13, %17 : vector<2x128xi1>, vector<2x128xf32>
    %cst_12 = arith.constant dense<0xFF800000> : vector<2xf32>
    %19 = vector.multi_reduction <maximumf>, %18, %cst_12 [1] : vector<2x128xf32> to vector<2xf32>
    %20 = vector.shape_cast %19 : vector<2xf32> to vector<2x1xf32>
    %21 = vector.broadcast %20 : vector<2x1xf32> to vector<2x128xf32>
    %22 = arith.subf %18, %21 : vector<2x128xf32>
    %23 = math.exp %22 : vector<2x128xf32>
    %cst_13 = arith.constant dense<0.000000e+00> : vector<2xf32>
    %24 = vector.multi_reduction <add>, %23, %cst_13 [1] : vector<2x128xf32> to vector<2xf32>
    %25 = vector.shape_cast %24 : vector<2xf32> to vector<2x1xf32>
    %26 = math.log %25 : vector<2x1xf32>
    %27 = vector.broadcast %26 : vector<2x1xf32> to vector<2x128xf32>
    %28 = arith.subf %22, %27 : vector<2x128xf32>
    %c0_14 = arith.constant 0 : index
    %c0_15 = arith.constant 0 : index
    %29 = vector.load %arg5[%c0_14, %c0_15] : memref<2x128xf32, #tpu.memory_space<vmem>>, vector<2x128xf32>
    tpu.vector_store %arg5[%c0_14, %c0_15], %28 {strides = array<i32>} : memref<2x128xf32, #tpu.memory_space<vmem>>, vector<2x128xf32>,
    return
  }
}

</mosaic_0001>

<llo_original>
// kernel: cnn_mnist_forward.3
$region0: #{cnn_mnist_forward.3}
  #allocation0 [shape = 'u32[]', space=smem, size = 0x4, offset = 0x4, fixed_abs, tag = 'smem constant byte address 0x4 - core index']
  #allocation1 [shape = 'u32[144,128]{1,0:T(1,128)}', space=vmem, size = 0x12000, scoped, tag = 'internal scratch']
  %s0 = inlined_call_operand.vmem [shape: bf16[4,288,25], index: 0, kind: input, shape index: {}]
  %s1 = inlined_call_operand.vmem [shape: bf16[25,128], index: 1, kind: input, shape index: {}]
  %s2 = inlined_call_operand.vmem [shape: f32[1,128], index: 2, kind: input, shape index: {}]
  %s3 = inlined_call_operand.vmem [shape: bf16[288,128], index: 3, kind: output, shape index: {}]
  %s4 = sld [smem:[#allocation0]]
  $region86: #{cnn_mnist_forward.3} parent=0
    _
  %s6 = ssub.s32 1, %s4
  %s7 = scalar_select 0, %s6, %s4
  $region1: #{cnn_mnist_forward.3} parent=0
    #allocation2 [shape = 'u8[294912]{0}', space=vmem, size = 0x48000, scoped, tag = 'input window, operand 0']
    loop: start=0, step=1, limit=4
    $region2: #{cnn_mnist_forward.3} parent=1 // loop_pre_header
      _
    $region3: #{cnn_mnist_forward.3} parent=1 // loop_header
      %s9 = sphi 0, %s13
      %p10 = scmp.ge.s32.totalorder %s9, 4
      %s19 = sphi 0, %s21
      %s22 = sphi 0, %s19
      %s23 = sphi 0, %s22
      %s39 = sphi 0, %s23
      %s43 = sphi 0, %s43
      %s45 = sphi 0, %s43
      %s46 = sphi 0, %s45
      %s60 = sphi 0, %s46
      %s64 = sphi 0, %s64
      %s66 = sphi 0, %s64
      %s67 = sphi 0, %s66
      %s81 = sphi 0, %s67
      %s87 = sphi 0, %s89
      %s90 = sphi 0, %s87
      %s91 = sphi 0, %s90
      %s107 = sphi 0, %s91
    $region4: #{cnn_mnist_forward.3} parent=1 // loop_header_branch
      %12 = sbr.rel (%p10) target = $region8
    $region5: #{cnn_mnist_forward.3} parent=1 // loop_body
      %s14 = ssub.s32 %s9, 1
      %s15 = ssub.s32 %s9, 2
      %s16 = sadd.s32 %s9, 1
      %s17 = ssub.s32 %s9, %s16
      %p18 = scmp.eq.s32.totalorder %s17, 0
      %s20 = sadd.s32 %s19, 1
      %s21 = scalar_select %p18, %s19, %s20
      %p24 = pneg %p18
      %p25 = scmp.eq.s32.totalorder %s9, 1
      %p26 = por %p24, %p25
      %p27 = scmp.ne.s32.totalorder %s19, %s22
      %p28 = scmp.eq.s32.totalorder %s9, 0
      %p29 = por %p27, %p28
      %p30 = scmp.ne.s32.totalorder %s19, %s22
      %p31 = scmp.eq.s32.totalorder %s14, 1
      %p32 = por %p30, %p31
      %p33 = scmp.ne.s32.totalorder %s22, %s23
      %p34 = scmp.eq.s32.totalorder %s14, 0
      %p35 = por %p33, %p34
      %p36 = scmp.ne.s32.totalorder %s22, %s23
      %p37 = scmp.eq.s32.totalorder %s15, 1
      %p38 = por %p36, %p37
      %p40 = scmp.ne.s32.totalorder %s23, %s39
      %p41 = scmp.eq.s32.totalorder %s15, 0
      %p42 = por %p40, %p41
      %s44 = sadd.s32 %s43, 1
      %p47 = scmp.eq.s32.totalorder %s9, 1
      %p48 = scmp.ne.s32.totalorder %s43, %s45
      %p49 = scmp.eq.s32.totalorder %s9, 0
      %p50 = por %p48, %p49
      %p51 = scmp.ne.s32.totalorder %s43, %s45
      %p52 = scmp.eq.s32.totalorder %s14, 1
      %p53 = por %p51, %p52
      %p54 = scmp.ne.s32.totalorder %s45, %s46
      %p55 = scmp.eq.s32.totalorder %s14, 0
      %p56 = por %p54, %p55
      %p57 = scmp.ne.s32.totalorder %s45, %s46
      %p58 = scmp.eq.s32.totalorder %s15, 1
      %p59 = por %p57, %p58
      %p61 = scmp.ne.s32.totalorder %s46, %s60
      %p62 = scmp.eq.s32.totalorder %s15, 0
      %p63 = por %p61, %p62
      %s65 = sadd.s32 %s64, 1
      %p68 = scmp.eq.s32.totalorder %s9, 1
      %p69 = scmp.ne.s32.totalorder %s64, %s66
      %p70 = scmp.eq.s32.totalorder %s9, 0
      %p71 = por %p69, %p70
      %p72 = scmp.ne.s32.totalorder %s64, %s66
      %p73 = scmp.eq.s32.totalorder %s14, 1
      %p74 = por %p72, %p73
      %p75 = scmp.ne.s32.totalorder %s66, %s67
      %p76 = scmp.eq.s32.totalorder %s14, 0
      %p77 = por %p75, %p76
      %p78 = scmp.ne.s32.totalorder %s66, %s67
      %p79 = scmp.eq.s32.totalorder %s15, 1
      %p80 = por %p78, %p79
      %p82 = scmp.ne.s32.totalorder %s67, %s81
      %p83 = scmp.eq.s32.totalorder %s15, 0
      %p84 = por %p82, %p83
      %s85 = ssub.s32 %s9, %s16
      %p86 = scmp.eq.s32.totalorder %s85, 0
      %s88 = sadd.s32 %s87, 1
      %s89 = scalar_select %p86, %s87, %s88
      %p92 = pneg %p86
      %p93 = scmp.eq.s32.totalorder %s9, 1
      %p94 = por %p92, %p93
      %p95 = scmp.ne.s32.totalorder %s87, %s90
      %p96 = scmp.eq.s32.totalorder %s9, 0
      %p97 = por %p95, %p96
      %p98 = scmp.ne.s32.totalorder %s87, %s90
      %p99 = scmp.eq.s32.totalorder %s14, 1
      %p100 = por %p98, %p99
      %p101 = scmp.ne.s32.totalorder %s90, %s91
      %p102 = scmp.eq.s32.totalorder %s14, 0
      %p103 = por %p101, %p102
      %p104 = scmp.ne.s32.totalorder %s90, %s91
      %p105 = scmp.eq.s32.totalorder %s15, 1
      %p106 = por %p104, %p105
      %p108 = scmp.ne.s32.totalorder %s91, %s107
      %p109 = scmp.eq.s32.totalorder %s15, 0
      %p110 = por %p108, %p109
      %p111 = scmp.le.s32.totalorder 1, %s9
      %p112 = scmp.lt.s32.totalorder %s9, 3
      %p113 = pnand %p111, %p112
      %p114 = pneg %p113
      // Predicated region
      $region9: #{cnn_mnist_forward.3} parent=5 // pred_check
        _
      $region10: #{cnn_mnist_forward.3} parent=5 // pred_check_branch
        %116 = sbr.rel (%p113) target = $region12
      $region11: #{cnn_mnist_forward.3} parent=5 // pred_region
        %s117 = ssub.s32 %s9, 1
        // Predicated region
        $region13: #{cnn_mnist_forward.3} parent=11 // pred_check
          %p118 = pneg %p56
        $region14: #{cnn_mnist_forward.3} parent=11 // pred_check_branch
          %120 = sbr.rel (%p118) target = $region16
        $region15: #{cnn_mnist_forward.3} parent=11 // pred_region
          _
        $region16: #{cnn_mnist_forward.3} parent=11 // pred_fallthru
          _
        // Predicated region
        $region17: #{cnn_mnist_forward.3} parent=11 // pred_check
          %p121 = pneg %p77
        $region18: #{cnn_mnist_forward.3} parent=11 // pred_check_branch
          %123 = sbr.rel (%p121) target = $region20
        $region19: #{cnn_mnist_forward.3} parent=11 // pred_region
          _
        $region20: #{cnn_mnist_forward.3} parent=11 // pred_fallthru
          _
      $region12: #{cnn_mnist_forward.3} parent=5 // pred_fallthru
        _
      %p124 = scmp.lt.s32.totalorder %s9, 2
      // Predicated region
      $region21: #{cnn_mnist_forward.3} parent=5 // pred_check
        %p125 = pneg %p124
      $region22: #{cnn_mnist_forward.3} parent=5 // pred_check_branch
        %127 = sbr.rel (%p125) target = $region24
      $region23: #{cnn_mnist_forward.3} parent=5 // pred_region
        // Predicated region
        $region25: #{cnn_mnist_forward.3} parent=23 // pred_check
          %p128 = pneg %p29
        $region26: #{cnn_mnist_forward.3} parent=23 // pred_check_branch
          %130 = sbr.rel (%p128) target = $region28
        $region27: #{cnn_mnist_forward.3} parent=23 // pred_region
          %s131 = sand.u32 %s19, 1
          %s132 = sand.u32 %s19, 1
          %s133 = smul.addr %s132, 288
          %s134 = scalar_lea.vmem [#allocation2], %s133
          %s135 = smul.u32 18, %s9
          %s136 = smul.addr %s135, 4
          %s137 = scalar_lea.vmem %s0, %s136
          // Predicated region
          $region29: #{cnn_mnist_forward.3} parent=27 // pred_check
            _
          $region30: #{cnn_mnist_forward.3} parent=27 // pred_check_branch
            %139 = sbr.rel (0) target = $region32
          $region31: #{cnn_mnist_forward.3} parent=27 // pred_region
            // Predicated region
            $region33: #{cnn_mnist_forward.3} parent=31 // pred_check
              _
            $region34: #{cnn_mnist_forward.3} parent=31 // pred_check_branch
              %141 = sbr.rel target = $region36
            $region35: #{cnn_mnist_forward.3} parent=31 // pred_region
              // Predicated region
              $region48: #{cnn_mnist_forward.3} parent=35 // pred_check
                _
              $region49: #{cnn_mnist_forward.3} parent=35 // pred_check_branch
                %299 = sbr.rel (0) target = $region51
              $region50: #{cnn_mnist_forward.3} parent=35 // pred_region
                loop: start=0, step=1, limit=1
                $region52: #{cnn_mnist_forward.3} parent=50 // loop_pre_header
                  _
                $region53: #{cnn_mnist_forward.3} parent=50 // loop_header
                  %s301 = sphi 0, %s305
                  %p302 = scmp.ge.s32.totalorder %s301, 1
                  %s306 = sphi %s137, %s137
                  %s307 = sphi %s134, %s134
                $region54: #{cnn_mnist_forward.3} parent=50 // loop_header_branch
                  %304 = sbr.rel (%p302) target = $region58
                $region55: #{cnn_mnist_forward.3} parent=50 // loop_body
                  _
                $region56: #{cnn_mnist_forward.3} parent=50 // loop_footer
                  %s305 = sadd.s32 1, %s301
                $region57: #{cnn_mnist_forward.3} parent=50 // loop_footer_branch
                  %300 = sbr.rel target = $region53
                $region58: #{cnn_mnist_forward.3} parent=50 // loop_exit
                  _
                %s309 = ssub.s32 16, 1
                loop: start=0, step=1, limit=1
                $region59: #{cnn_mnist_forward.3} parent=50 // loop_pre_header
                  _
                $region60: #{cnn_mnist_forward.3} parent=50 // loop_header
                  %s311 = sphi 0, %s315
                  %p312 = scmp.ge.s32.totalorder %s311, 1
                  %s316 = sphi %s137, %s137
                  %s317 = sphi %s134, %s134
                $region61: #{cnn_mnist_forward.3} parent=50 // loop_header_branch
                  %314 = sbr.rel (%p312) target = $region65
                $region62: #{cnn_mnist_forward.3} parent=50 // loop_body
                  %v318 = vld [vmem:[%s316] sm:%s309]
                  %319 = vst [vmem:[%s317] sm:%s309] %v318
                  %v320 = vld [vmem:[%s316 + $0x4] sm:%s309]
                  %321 = vst [vmem:[%s317 + $0x4] sm:%s309] %v320
                  %v322 = vld [vmem:[%s316 + $0x8] sm:%s309]
                  %323 = vst [vmem:[%s317 + $0x8] sm:%s309] %v322
                  %v324 = vld [vmem:[%s316 + $0xc] sm:%s309]
                  %325 = vst [vmem:[%s317 + $0xc] sm:%s309] %v324
                  %v326 = vld [vmem:[%s316 + $0x10] sm:%s309]
                  %327 = vst [vmem:[%s317 + $0x10] sm:%s309] %v326
                  %v328 = vld [vmem:[%s316 + $0x14] sm:%s309]
                  %329 = vst [vmem:[%s317 + $0x14] sm:%s309] %v328
                  %v330 = vld [vmem:[%s316 + $0x18] sm:%s309]
                  %331 = vst [vmem:[%s317 + $0x18] sm:%s309] %v330
                  %v332 = vld [vmem:[%s316 + $0x1c] sm:%s309]
                  %333 = vst [vmem:[%s317 + $0x1c] sm:%s309] %v332
                  %v334 = vld [vmem:[%s316 + $0x20] sm:%s309]
                  %335 = vst [vmem:[%s317 + $0x20] sm:%s309] %v334
                  %v336 = vld [vmem:[%s316 + $0x24] sm:%s309]
                  %337 = vst [vmem:[%s317 + $0x24] sm:%s309] %v336
                  %v338 = vld [vmem:[%s316 + $0x28] sm:%s309]
                  %339 = vst [vmem:[%s317 + $0x28] sm:%s309] %v338
                  %v340 = vld [vmem:[%s316 + $0x2c] sm:%s309]
                  %341 = vst [vmem:[%s317 + $0x2c] sm:%s309] %v340
                  %v342 = vld [vmem:[%s316 + $0x30] sm:%s309]
                  %343 = vst [vmem:[%s317 + $0x30] sm:%s309] %v342
                  %v344 = vld [vmem:[%s316 + $0x34] sm:%s309]
                  %345 = vst [vmem:[%s317 + $0x34] sm:%s309] %v344
                  %v346 = vld [vmem:[%s316 + $0x38] sm:%s309]
                  %347 = vst [vmem:[%s317 + $0x38] sm:%s309] %v346
                  %v348 = vld [vmem:[%s316 + $0x3c] sm:%s309]
                  %349 = vst [vmem:[%s317 + $0x3c] sm:%s309] %v348
                  %v350 = vld [vmem:[%s316 + $0x40] sm:%s309]
                  %351 = vst [vmem:[%s317 + $0x40] sm:%s309] %v350
                  %v352 = vld [vmem:[%s316 + $0x44] sm:%s309]
                  %353 = vst [vmem:[%s317 + $0x44] sm:%s309] %v352
                  %v354 = vld [vmem:[%s316 + $0x90] sm:%s309]
                  %355 = vst [vmem:[%s317 + $0x48] sm:%s309] %v354
                  %v356 = vld [vmem:[%s316 + $0x94] sm:%s309]
                  %357 = vst [vmem:[%s317 + $0x4c] sm:%s309] %v356
                  %v358 = vld [vmem:[%s316 + $0x98] sm:%s309]
                  %359 = vst [vmem:[%s317 + $0x50] sm:%s309] %v358
                  %v360 = vld [vmem:[%s316 + $0x9c] sm:%s309]
                  %361 = vst [vmem:[%s317 + $0x54] sm:%s309] %v360
                  %v362 = vld [vmem:[%s316 + $0xa0] sm:%s309]
                  %363 = vst [vmem:[%s317 + $0x58] sm:%s309] %v362
                  %v364 = vld [vmem:[%s316 + $0xa4] sm:%s309]
                  %365 = vst [vmem:[%s317 + $0x5c] sm:%s309] %v364
                  %v366 = vld [vmem:[%s316 + $0xa8] sm:%s309]
                  %367 = vst [vmem:[%s317 + $0x60] sm:%s309] %v366
                  %v368 = vld [vmem:[%s316 + $0xac] sm:%s309]
                  %369 = vst [vmem:[%s317 + $0x64] sm:%s309] %v368
                  %v370 = vld [vmem:[%s316 + $0xb0] sm:%s309]
                  %371 = vst [vmem:[%s317 + $0x68] sm:%s309] %v370
                  %v372 = vld [vmem:[%s316 + $0xb4] sm:%s309]
                  %373 = vst [vmem:[%s317 + $0x6c] sm:%s309] %v372
                  %v374 = vld [vmem:[%s316 + $0xb8] sm:%s309]
                  %375 = vst [vmem:[%s317 + $0x70] sm:%s309] %v374
                  %v376 = vld [vmem:[%s316 + $0xbc] sm:%s309]
                  %377 = vst [vmem:[%s317 + $0x74] sm:%s309] %v376
                  %v378 = vld [vmem:[%s316 + $0xc0] sm:%s309]
                  %379 = vst [vmem:[%s317 + $0x78] sm:%s309] %v378
                  %v380 = vld [vmem:[%s316 + $0xc4] sm:%s309]
                  %381 = vst [vmem:[%s317 + $0x7c] sm:%s309] %v380
                  %v382 = vld [vmem:[%s316 + $0xc8] sm:%s309]
                  %383 = vst [vmem:[%s317 + $0x80] sm:%s309] %v382
                  %v384 = vld [vmem:[%s316 + $0xcc] sm:%s309]
                  %385 = vst [vmem:[%s317 + $0x84] sm:%s309] %v384
                  %v386 = vld [vmem:[%s316 + $0xd0] sm:%s309]
                  %387 = vst [vmem:[%s317 + $0x88] sm:%s309] %v386
                  %v388 = vld [vmem:[%s316 + $0xd4] sm:%s309]
                  %389 = vst [vmem:[%s317 + $0x8c] sm:%s309] %v388
                  %v390 = vld [vmem:[%s316 + $0x120] sm:%s309]
                  %391 = vst [vmem:[%s317 + $0x90] sm:%s309] %v390
                  %v392 = vld [vmem:[%s316 + $0x124] sm:%s309]
                  %393 = vst [vmem:[%s317 + $0x94] sm:%s309] %v392
                  %v394 = vld [vmem:[%s316 + $0x128] sm:%s309]
                  %395 = vst [vmem:[%s317 + $0x98] sm:%s309] %v394
                  %v396 = vld [vmem:[%s316 + $0x12c] sm:%s309]
                  %397 = vst [vmem:[%s317 + $0x9c] sm:%s309] %v396
                  %v398 = vld [vmem:[%s316 + $0x130] sm:%s309]
                  %399 = vst [vmem:[%s317 + $0xa0] sm:%s309] %v398
                  %v400 = vld [vmem:[%s316 + $0x134] sm:%s309]
                  %401 = vst [vmem:[%s317 + $0xa4] sm:%s309] %v400
                  %v402 = vld [vmem:[%s316 + $0x138] sm:%s309]
                  %403 = vst [vmem:[%s317 + $0xa8] sm:%s309] %v402
                  %v404 = vld [vmem:[%s316 + $0x13c] sm:%s309]
                  %405 = vst [vmem:[%s317 + $0xac] sm:%s309] %v404
                  %v406 = vld [vmem:[%s316 + $0x140] sm:%s309]
                  %407 = vst [vmem:[%s317 + $0xb0] sm:%s309] %v406
                  %v408 = vld [vmem:[%s316 + $0x144] sm:%s309]
                  %409 = vst [vmem:[%s317 + $0xb4] sm:%s309] %v408
                  %v410 = vld [vmem:[%s316 + $0x148] sm:%s309]
                  %411 = vst [vmem:[%s317 + $0xb8] sm:%s309] %v410
                  %v412 = vld [vmem:[%s316 + $0x14c] sm:%s309]
                  %413 = vst [vmem:[%s317 + $0xbc] sm:%s309] %v412
                  %v414 = vld [vmem:[%s316 + $0x150] sm:%s309]
                  %415 = vst [vmem:[%s317 + $0xc0] sm:%s309] %v414
                  %v416 = vld [vmem:[%s316 + $0x154] sm:%s309]
                  %417 = vst [vmem:[%s317 + $0xc4] sm:%s309] %v416
                  %v418 = vld [vmem:[%s316 + $0x158] sm:%s309]
                  %419 = vst [vmem:[%s317 + $0xc8] sm:%s309] %v418
                  %v420 = vld [vmem:[%s316 + $0x15c] sm:%s309]
                  %421 = vst [vmem:[%s317 + $0xcc] sm:%s309] %v420
                  %v422 = vld [vmem:[%s316 + $0x160] sm:%s309]
                  %423 = vst [vmem:[%s317 + $0xd0] sm:%s309] %v422
                  %v424 = vld [vmem:[%s316 + $0x164] sm:%s309]
                  %425 = vst [vmem:[%s317 + $0xd4] sm:%s309] %v424
                  %v426 = vld [vmem:[%s316 + $0x1b0] sm:%s309]
                  %427 = vst [vmem:[%s317 + $0xd8] sm:%s309] %v426
                  %v428 = vld [vmem:[%s316 + $0x1b4] sm:%s309]
                  %429 = vst [vmem:[%s317 + $0xdc] sm:%s309] %v428
                  %v430 = vld [vmem:[%s316 + $0x1b8] sm:%s309]
                  %431 = vst [vmem:[%s317 + $0xe0] sm:%s309] %v430
                  %v432 = vld [vmem:[%s316 + $0x1bc] sm:%s309]
                  %433 = vst [vmem:[%s317 + $0xe4] sm:%s309] %v432
                  %v434 = vld [vmem:[%s316 + $0x1c0] sm:%s309]
                  %435 = vst [vmem:[%s317 + $0xe8] sm:%s309] %v434
                  %v436 = vld [vmem:[%s316 + $0x1c4] sm:%s309]
                  %437 = vst [vmem:[%s317 + $0xec] sm:%s309] %v436
                  %v438 = vld [vmem:[%s316 + $0x1c8] sm:%s309]
                  %439 = vst [vmem:[%s317 + $0xf0] sm:%s309] %v438
                  %v440 = vld [vmem:[%s316 + $0x1cc] sm:%s309]
                  %441 = vst [vmem:[%s317 + $0xf4] sm:%s309] %v440
                  %v442 = vld [vmem:[%s316 + $0x1d0] sm:%s309]
                  %443 = vst [vmem:[%s317 + $0xf8] sm:%s309] %v442
                  %v444 = vld [vmem:[%s316 + $0x1d4] sm:%s309]
                  %445 = vst [vmem:[%s317 + $0xfc] sm:%s309] %v444
                  %v446 = vld [vmem:[%s316 + $0x1d8] sm:%s309]
                  %447 = vst [vmem:[%s317 + $0x100] sm:%s309] %v446
                  %v448 = vld [vmem:[%s316 + $0x1dc] sm:%s309]
                  %449 = vst [vmem:[%s317 + $0x104] sm:%s309] %v448
                  %v450 = vld [vmem:[%s316 + $0x1e0] sm:%s309]
                  %451 = vst [vmem:[%s317 + $0x108] sm:%s309] %v450
                  %v452 = vld [vmem:[%s316 + $0x1e4] sm:%s309]
                  %453 = vst [vmem:[%s317 + $0x10c] sm:%s309] %v452
                  %v454 = vld [vmem:[%s316 + $0x1e8] sm:%s309]
                  %455 = vst [vmem:[%s317 + $0x110] sm:%s309] %v454
                  %v456 = vld [vmem:[%s316 + $0x1ec] sm:%s309]
                  %457 = vst [vmem:[%s317 + $0x114] sm:%s309] %v456
                  %v458 = vld [vmem:[%s316 + $0x1f0] sm:%s309]
                  %459 = vst [vmem:[%s317 + $0x118] sm:%s309] %v458
                  %v460 = vld [vmem:[%s316 + $0x1f4] sm:%s309]
                  %461 = vst [vmem:[%s317 + $0x11c] sm:%s309] %v460
                $region63: #{cnn_mnist_forward.3} parent=50 // loop_footer
                  %s315 = sadd.s32 1, %s311
                $region64: #{cnn_mnist_forward.3} parent=50 // loop_footer_branch
                  %310 = sbr.rel target = $region60
                $region65: #{cnn_mnist_forward.3} parent=50 // loop_exit
                  _
              $region51: #{cnn_mnist_forward.3} parent=35 // pred_fallthru
                _
            $region36: #{cnn_mnist_forward.3} parent=31 // pred_fallthru
              _
            // Predicated region
            $region37: #{cnn_mnist_forward.3} parent=31 // pred_check
              _
            $region38: #{cnn_mnist_forward.3} parent=31 // pred_check_branch
              %143 = sbr.rel (0) target = $region40
            $region39: #{cnn_mnist_forward.3} parent=31 // pred_region
              %s145 = ssub.s32 16, 1
              loop: start=0, step=1, limit=1
              $region41: #{cnn_mnist_forward.3} parent=39 // loop_pre_header
                _
              $region42: #{cnn_mnist_forward.3} parent=39 // loop_header
                %s147 = sphi 0, %s151
                %p148 = scmp.ge.s32.totalorder %s147, 1
                %s152 = sphi %s137, %s137
                %s153 = sphi %s134, %s134
              $region43: #{cnn_mnist_forward.3} parent=39 // loop_header_branch
                %150 = sbr.rel (%p148) target = $region47
              $region44: #{cnn_mnist_forward.3} parent=39 // loop_body
                %v154 = vld [vmem:[%s152] sm:%s145]
                %155 = vst [vmem:[%s153] sm:%s145] %v154
                %v156 = vld [vmem:[%s152 + $0x4] sm:%s145]
                %157 = vst [vmem:[%s153 + $0x4] sm:%s145] %v156
                %v158 = vld [vmem:[%s152 + $0x8] sm:%s145]
                %159 = vst [vmem:[%s153 + $0x8] sm:%s145] %v158
                %v160 = vld [vmem:[%s152 + $0xc] sm:%s145]
                %161 = vst [vmem:[%s153 + $0xc] sm:%s145] %v160
                %v162 = vld [vmem:[%s152 + $0x10] sm:%s145]
                %163 = vst [vmem:[%s153 + $0x10] sm:%s145] %v162
                %v164 = vld [vmem:[%s152 + $0x14] sm:%s145]
                %165 = vst [vmem:[%s153 + $0x14] sm:%s145] %v164
                %v166 = vld [vmem:[%s152 + $0x18] sm:%s145]
                %167 = vst [vmem:[%s153 + $0x18] sm:%s145] %v166
                %v168 = vld [vmem:[%s152 + $0x1c] sm:%s145]
                %169 = vst [vmem:[%s153 + $0x1c] sm:%s145] %v168
                %v170 = vld [vmem:[%s152 + $0x20] sm:%s145]
                %171 = vst [vmem:[%s153 + $0x20] sm:%s145] %v170
                %v172 = vld [vmem:[%s152 + $0x24] sm:%s145]
                %173 = vst [vmem:[%s153 + $0x24] sm:%s145] %v172
                %v174 = vld [vmem:[%s152 + $0x28] sm:%s145]
                %175 = vst [vmem:[%s153 + $0x28] sm:%s145] %v174
                %v176 = vld [vmem:[%s152 + $0x2c] sm:%s145]
                %177 = vst [vmem:[%s153 + $0x2c] sm:%s145] %v176
                %v178 = vld [vmem:[%s152 + $0x30] sm:%s145]
                %179 = vst [vmem:[%s153 + $0x30] sm:%s145] %v178
                %v180 = vld [vmem:[%s152 + $0x34] sm:%s145]
                %181 = vst [vmem:[%s153 + $0x34] sm:%s145] %v180
                %v182 = vld [vmem:[%s152 + $0x38] sm:%s145]
                %183 = vst [vmem:[%s153 + $0x38] sm:%s145] %v182
                %v184 = vld [vmem:[%s152 + $0x3c] sm:%s145]
                %185 = vst [vmem:[%s153 + $0x3c] sm:%s145] %v184
                %v186 = vld [vmem:[%s152 + $0x40] sm:%s145]
                %187 = vst [vmem:[%s153 + $0x40] sm:%s145] %v186
                %v188 = vld [vmem:[%s152 + $0x44] sm:%s145]
                %189 = vst [vmem:[%s153 + $0x44] sm:%s145] %v188
                %v190 = vld [vmem:[%s152 + $0x90] sm:%s145]
                %191 = vst [vmem:[%s153 + $0x48] sm:%s145] %v190
                %v192 = vld [vmem:[%s152 + $0x94] sm:%s145]
                %193 = vst [vmem:[%s153 + $0x4c] sm:%s145] %v192
                %v194 = vld [vmem:[%s152 + $0x98] sm:%s145]
                %195 = vst [vmem:[%s153 + $0x50] sm:%s145] %v194
                %v196 = vld [vmem:[%s152 + $0x9c] sm:%s145]
                %197 = vst [vmem:[%s153 + $0x54] sm:%s145] %v196
                %v198 = vld [vmem:[%s152 + $0xa0] sm:%s145]
                %199 = vst [vmem:[%s153 + $0x58] sm:%s145] %v198
                %v200 = vld [vmem:[%s152 + $0xa4] sm:%s145]
                %201 = vst [vmem:[%s153 + $0x5c] sm:%s145] %v200
                %v202 = vld [vmem:[%s152 + $0xa8] sm:%s145]
                %203 = vst [vmem:[%s153 + $0x60] sm:%s145] %v202
                %v204 = vld [vmem:[%s152 + $0xac] sm:%s145]
                %205 = vst [vmem:[%s153 + $0x64] sm:%s145] %v204
                %v206 = vld [vmem:[%s152 + $0xb0] sm:%s145]
                %207 = vst [vmem:[%s153 + $0x68] sm:%s145] %v206
                %v208 = vld [vmem:[%s152 + $0xb4] sm:%s145]
                %209 = vst [vmem:[%s153 + $0x6c] sm:%s145] %v208
                %v210 = vld [vmem:[%s152 + $0xb8] sm:%s145]
                %211 = vst [vmem:[%s153 + $0x70] sm:%s145] %v210
                %v212 = vld [vmem:[%s152 + $0xbc] sm:%s145]
                %213 = vst [vmem:[%s153 + $0x74] sm:%s145] %v212
                %v214 = vld [vmem:[%s152 + $0xc0] sm:%s145]
                %215 = vst [vmem:[%s153 + $0x78] sm:%s145] %v214
                %v216 = vld [vmem:[%s152 + $0xc4] sm:%s145]
                %217 = vst [vmem:[%s153 + $0x7c] sm:%s145] %v216
                %v218 = vld [vmem:[%s152 + $0xc8] sm:%s145]
                %219 = vst [vmem:[%s153 + $0x80] sm:%s145] %v218
                %v220 = vld [vmem:[%s152 + $0xcc] sm:%s145]
                %221 = vst [vmem:[%s153 + $0x84] sm:%s145] %v220
                %v222 = vld [vmem:[%s152 + $0xd0] sm:%s145]
                %223 = vst [vmem:[%s153 + $0x88] sm:%s145] %v222
                %v224 = vld [vmem:[%s152 + $0xd4] sm:%s145]
                %225 = vst [vmem:[%s153 + $0x8c] sm:%s145] %v224
                %v226 = vld [vmem:[%s152 + $0x120] sm:%s145]
                %227 = vst [vmem:[%s153 + $0x90] sm:%s145] %v226
                %v228 = vld [vmem:[%s152 + $0x124] sm:%s145]
                %229 = vst [vmem:[%s153 + $0x94] sm:%s145] %v228
                %v230 = vld [vmem:[%s152 + $0x128] sm:%s145]
                %231 = vst [vmem:[%s153 + $0x98] sm:%s145] %v230
                %v232 = vld [vmem:[%s152 + $0x12c] sm:%s145]
                %233 = vst [vmem:[%s153 + $0x9c] sm:%s145] %v232
                %v234 = vld [vmem:[%s152 + $0x130] sm:%s145]
                %235 = vst [vmem:[%s153 + $0xa0] sm:%s145] %v234
                %v236 = vld [vmem:[%s152 + $0x134] sm:%s145]
                %237 = vst [vmem:[%s153 + $0xa4] sm:%s145] %v236
                %v238 = vld [vmem:[%s152 + $0x138] sm:%s145]
                %239 = vst [vmem:[%s153 + $0xa8] sm:%s145] %v238
                %v240 = vld [vmem:[%s152 + $0x13c] sm:%s145]
                %241 = vst [vmem:[%s153 + $0xac] sm:%s145] %v240
                %v242 = vld [vmem:[%s152 + $0x140] sm:%s145]
                %243 = vst [vmem:[%s153 + $0xb0] sm:%s145] %v242
                %v244 = vld [vmem:[%s152 + $0x144] sm:%s145]
                %245 = vst [vmem:[%s153 + $0xb4] sm:%s145] %v244
                %v246 = vld [vmem:[%s152 + $0x148] sm:%s145]
                %247 = vst [vmem:[%s153 + $0xb8] sm:%s145] %v246
                %v248 = vld [vmem:[%s152 + $0x14c] sm:%s145]
                %249 = vst [vmem:[%s153 + $0xbc] sm:%s145] %v248
                %v250 = vld [vmem:[%s152 + $0x150] sm:%s145]
                %251 = vst [vmem:[%s153 + $0xc0] sm:%s145] %v250
                %v252 = vld [vmem:[%s152 + $0x154] sm:%s145]
                %253 = vst [vmem:[%s153 + $0xc4] sm:%s145] %v252
                %v254 = vld [vmem:[%s152 + $0x158] sm:%s145]
                %255 = vst [vmem:[%s153 + $0xc8] sm:%s145] %v254
                %v256 = vld [vmem:[%s152 + $0x15c] sm:%s145]
                %257 = vst [vmem:[%s153 + $0xcc] sm:%s145] %v256
                %v258 = vld [vmem:[%s152 + $0x160] sm:%s145]
                %259 = vst [vmem:[%s153 + $0xd0] sm:%s145] %v258
                %v260 = vld [vmem:[%s152 + $0x164] sm:%s145]
                %261 = vst [vmem:[%s153 + $0xd4] sm:%s145] %v260
                %v262 = vld [vmem:[%s152 + $0x1b0] sm:%s145]
                %263 = vst [vmem:[%s153 + $0xd8] sm:%s145] %v262
                %v264 = vld [vmem:[%s152 + $0x1b4] sm:%s145]
                %265 = vst [vmem:[%s153 + $0xdc] sm:%s145] %v264
                %v266 = vld [vmem:[%s152 + $0x1b8] sm:%s145]
                %267 = vst [vmem:[%s153 + $0xe0] sm:%s145] %v266
                %v268 = vld [vmem:[%s152 + $0x1bc] sm:%s145]
                %269 = vst [vmem:[%s153 + $0xe4] sm:%s145] %v268
                %v270 = vld [vmem:[%s152 + $0x1c0] sm:%s145]
                %271 = vst [vmem:[%s153 + $0xe8] sm:%s145] %v270
                %v272 = vld [vmem:[%s152 + $0x1c4] sm:%s145]
                %273 = vst [vmem:[%s153 + $0xec] sm:%s145] %v272
                %v274 = vld [vmem:[%s152 + $0x1c8] sm:%s145]
                %275 = vst [vmem:[%s153 + $0xf0] sm:%s145] %v274
                %v276 = vld [vmem:[%s152 + $0x1cc] sm:%s145]
                %277 = vst [vmem:[%s153 + $0xf4] sm:%s145] %v276
                %v278 = vld [vmem:[%s152 + $0x1d0] sm:%s145]
                %279 = vst [vmem:[%s153 + $0xf8] sm:%s145] %v278
                %v280 = vld [vmem:[%s152 + $0x1d4] sm:%s145]
                %281 = vst [vmem:[%s153 + $0xfc] sm:%s145] %v280
                %v282 = vld [vmem:[%s152 + $0x1d8] sm:%s145]
                %283 = vst [vmem:[%s153 + $0x100] sm:%s145] %v282
                %v284 = vld [vmem:[%s152 + $0x1dc] sm:%s145]
                %285 = vst [vmem:[%s153 + $0x104] sm:%s145] %v284
                %v286 = vld [vmem:[%s152 + $0x1e0] sm:%s145]
                %287 = vst [vmem:[%s153 + $0x108] sm:%s145] %v286
                %v288 = vld [vmem:[%s152 + $0x1e4] sm:%s145]
                %289 = vst [vmem:[%s153 + $0x10c] sm:%s145] %v288
                %v290 = vld [vmem:[%s152 + $0x1e8] sm:%s145]
                %291 = vst [vmem:[%s153 + $0x110] sm:%s145] %v290
                %v292 = vld [vmem:[%s152 + $0x1ec] sm:%s145]
                %293 = vst [vmem:[%s153 + $0x114] sm:%s145] %v292
                %v294 = vld [vmem:[%s152 + $0x1f0] sm:%s145]
                %295 = vst [vmem:[%s153 + $0x118] sm:%s145] %v294
                %v296 = vld [vmem:[%s152 + $0x1f4] sm:%s145]
                %297 = vst [vmem:[%s153 + $0x11c] sm:%s145] %v296
              $region45: #{cnn_mnist_forward.3} parent=39 // loop_footer
                %s151 = sadd.s32 1, %s147
              $region46: #{cnn_mnist_forward.3} parent=39 // loop_footer_branch
                %146 = sbr.rel target = $region42
              $region47: #{cnn_mnist_forward.3} parent=39 // loop_exit
                _
            $region40: #{cnn_mnist_forward.3} parent=31 // pred_fallthru
              _
          $region32: #{cnn_mnist_forward.3} parent=27 // pred_fallthru
            _
          %462 = vnop
        $region28: #{cnn_mnist_forward.3} parent=23 // pred_fallthru
          _
      $region24: #{cnn_mnist_forward.3} parent=5 // pred_fallthru
        _
      %p463 = scmp.le.s32.totalorder 1, %s9
      %p464 = scmp.lt.s32.totalorder %s9, 3
      %p465 = pnand %p463, %p464
      %p466 = pneg %p465
      // Predicated region
      $region66: #{cnn_mnist_forward.3} parent=5 // pred_check
        _
      $region67: #{cnn_mnist_forward.3} parent=5 // pred_check_branch
        %468 = sbr.rel (%p465) target = $region69
      $region68: #{cnn_mnist_forward.3} parent=5 // pred_region
        %s469 = ssub.s32 %s9, 1
        %s470 = sand.u32 %s22, 1
        %s471 = sand.u32 %s22, 1
        %s472 = smul.addr %s471, 288
        %s473 = scalar_lea.vmem [#allocation2], %s472
        // Predicated region
        $region70: #{cnn_mnist_forward.3} parent=68 // pred_check
          %p474 = pneg %p35
        $region71: #{cnn_mnist_forward.3} parent=68 // pred_check_branch
          %476 = sbr.rel (%p474) target = $region73
        $region72: #{cnn_mnist_forward.3} parent=68 // pred_region
          _
        $region73: #{cnn_mnist_forward.3} parent=68 // pred_fallthru
          _
        %s477 = sand.u32 %s22, 1
        %s478 = sand.u32 %s22, 1
        %s479 = smul.addr %s478, 288
        %s480 = scalar_lea.vmem [#allocation2], %s479
        %p481 = pneg %p35
        %p482 = pneg %p32
        %p483 = pneg %p56
        %p484 = pneg %p53
        %p485 = pneg %p77
        %p486 = pneg %p74
        %p487 = pneg %p103
        %p488 = pneg %p100
        %s489 = smul.u32 18, %s14
        %p490 = scmp.lt.s32.totalorder %s489, 35
        %s491 = scalar_select %p490, %s489, 35
        %s492 = smul.addr %s491, 4
        %s493 = scalar_lea.vmem %s3, %s492
        %s494 = smul.u32 18, %s14
        %s495 = smul.u32 18, %s14
        %p496 = scmp.lt.s32.totalorder %s495, 35
        %s497 = scalar_select %p496, %s495, 35
        %s498 = smul.addr %s497, 4
        %s499 = scalar_lea.vmem %s3, %s498
        %s500 = smul.u32 18, %s14
        %v502 = vld [vmem:[%s1] sm:$0xf]
        %v503 = vld [vmem:[%s1 + $0x4] sm:$0xf]
        %v504 = vld [vmem:[%s1 + $0x8] sm:$0xf]
        %v505 = vld [vmem:[%s1 + $0xc] sm:$0x1]
        %v506 = vld [vmem:[%s473] sm:$0xf]
        %v507 = vld [vmem:[%s473 + $0x4] sm:$0xf]
        %v508 = vld [vmem:[%s473 + $0x8] sm:$0xf]
        %v509 = vld [vmem:[%s473 + $0xc] sm:$0xf]
        %v510 = vld [vmem:[%s473 + $0x10] sm:$0xf]
        %v511 = vld [vmem:[%s473 + $0x14] sm:$0xf]
        %v512 = vld [vmem:[%s473 + $0x18] sm:$0xf]
        %v513 = vld [vmem:[%s473 + $0x1c] sm:$0xf]
        %v514 = vld [vmem:[%s473 + $0x20] sm:$0xf]
        %v515 = vld [vmem:[%s473 + $0x24] sm:$0xf]
        %v516 = vld [vmem:[%s473 + $0x28] sm:$0xf]
        %v517 = vld [vmem:[%s473 + $0x2c] sm:$0xf]
        %v518 = vld [vmem:[%s473 + $0x30] sm:$0xf]
        %v519 = vld [vmem:[%s473 + $0x34] sm:$0xf]
        %v520 = vld [vmem:[%s473 + $0x38] sm:$0xf]
        %v521 = vld [vmem:[%s473 + $0x3c] sm:$0xf]
        %v522 = vld [vmem:[%s473 + $0x40] sm:$0xf]
        %v523 = vld [vmem:[%s473 + $0x44] sm:$0xf]
        %v542 = vunpack.c.l.b16 %v506
        %v543 = vunpack.c.l.b16 %v507
        %v544 = vunpack.c.l.b16 %v508
        %v545 = vunpack.c.l.b16 %v509
        %v546 = vunpack.c.l.b16 %v510
        %v547 = vunpack.c.l.b16 %v511
        %v548 = vunpack.c.l.b16 %v512
        %v549 = vunpack.c.l.b16 %v513
        %v550 = vunpack.c.l.b16 %v514
        %v551 = vunpack.c.l.b16 %v515
        %v552 = vunpack.c.l.b16 %v516
        %v553 = vunpack.c.l.b16 %v517
        %v554 = vunpack.c.l.b16 %v518
        %v555 = vunpack.c.l.b16 %v519
        %v556 = vunpack.c.l.b16 %v520
        %v557 = vunpack.c.l.b16 %v521
        %v558 = vunpack.c.l.b16 %v522
        %v559 = vunpack.c.l.b16 %v523
        %v560 = vpack.c.b16 %v543, %v542
        %v561 = vpack.c.b16 %v545, %v544
        %v562 = vpack.c.b16 %v547, %v546
        %v563 = vpack.c.b16 %v549, %v548
        %v564 = vpack.c.b16 %v551, %v550
        %v565 = vpack.c.b16 %v553, %v552
        %v566 = vpack.c.b16 %v555, %v554
        %v567 = vpack.c.b16 %v557, %v556
        %v568 = vpack.c.b16 %v559, %v558
        %v573 = vunpack.c.l.b16 %v502
        %v574 = vunpack.c.l.b16 %v503
        %v575 = vunpack.c.l.b16 %v504
        %v576 = vunpack.c.l.b16 %v505
        %v577 = vpack.c.b16 %v574, %v573
        %v578 = vpack.c.b16 %v576, %v575
        %vm580 = vcmask 203776
        %v582 = vsel %vm580, %v560, 0
        %v585 = vsel %vm580, %v561, 0
        %v588 = vsel %vm580, %v562, 0
        %v591 = vsel %vm580, %v563, 0
        %v594 = vsel %vm580, %v564, 0
        %v597 = vsel %vm580, %v565, 0
        %v600 = vsel %vm580, %v566, 0
        %v603 = vsel %vm580, %v567, 0
        %v606 = vsel %vm580, %v568, 0
        %vm608 = vcmask 1043456
        %vm609 = vcmask 1044480
        %v610 = vsel %vm608, 4294967295, 65535
        %v611 = vsel %vm609, %v610, 0
        %v613 = vand.u32 %v578, %v611
        %615 = vmatprep.subr.bf16.mxu0 0
        %616 = vmatpush1.bf16.msra.mxu0 0
        %617 = vmatprep.subr.bf16.mxu0 0
        %618 = vmatpush1.bf16.msra.mxu0 0
        %619 = vmatprep.subr.bf16.mxu0 0
        %620 = vmatpush1.bf16.msra.mxu0 0
        %621 = vmatprep.subr.bf16.mxu0 0
        %622 = vmatpush1.bf16.msra.mxu0 0
        %623 = vmatprep.subr.bf16.mxu0 0
        %624 = vmatpush1.bf16.msra.mxu0 0
        %625 = vmatprep.subr.bf16.mxu0 0
        %626 = vmatpush1.bf16.msra.mxu0 0
        %627 = vmatprep.subr.bf16.mxu0 0
        %628 = vmatpush1.bf16.msra.mxu0 %v613
        %629 = vmatprep.subr.bf16.mxu0 0
        %630 = vmatpush1.bf16.msra.mxu0 %v577
        %631 = vmatprep.subr.bf16.mxu0 0
        %632 = vmatpush2.bf16.msra.mxu0 0
        %633 = vmatprep.subr.bf16.mxu0 0
        %634 = vmatpush2.bf16.msra.mxu0 0
        %635 = vmatprep.subr.bf16.mxu0 0
        %636 = vmatpush2.bf16.msra.mxu0 0
        %637 = vmatprep.subr.bf16.mxu0 0
        %638 = vmatpush2.bf16.msra.mxu0 0
        %639 = vmatprep.subr.bf16.mxu0 0
        %640 = vmatpush2.bf16.msra.mxu0 0
        %641 = vmatprep.subr.bf16.mxu0 0
        %642 = vmatpush2.bf16.msra.mxu0 0
        %643 = vmatprep.subr.bf16.mxu0 0
        %644 = vmatpush2.bf16.msra.mxu0 0
        %645 = vmatprep.subr.bf16.mxu0 0
        %646 = vmatpush2.bf16.msra.mxu0 0
        %647 = vmatprep.mubr.bf16.mxu0 0
        %648 = vmatmul.mubr.bf16.gmra.mxu0 %v582
        %v649 = vpop.f32.mrf.mxu0
        %v650 = vadd.f32 0.0, %v649
        %v651 = vpop.f32.mrf.mxu0
        %v652 = vpop.f32.mrf.mxu0
        %v653 = vadd.f32 0.0, %v652
        %v654 = vpop.f32.mrf.mxu0
        %655 = vmatprep.mubr.bf16.mxu0 0
        %656 = vmatmul.mubr.bf16.gmra.mxu0 %v585
        %v657 = vpop.f32.mrf.mxu0
        %v658 = vadd.f32 0.0, %v657
        %v659 = vpop.f32.mrf.mxu0
        %v660 = vpop.f32.mrf.mxu0
        %v661 = vadd.f32 0.0, %v660
        %v662 = vpop.f32.mrf.mxu0
        %663 = vmatprep.mubr.bf16.mxu0 0
        %664 = vmatmul.mubr.bf16.gmra.mxu0 %v588
        %v665 = vpop.f32.mrf.mxu0
        %v666 = vadd.f32 0.0, %v665
        %v667 = vpop.f32.mrf.mxu0
        %v668 = vpop.f32.mrf.mxu0
        %v669 = vadd.f32 0.0, %v668
        %v670 = vpop.f32.mrf.mxu0
        %671 = vmatprep.mubr.bf16.mxu0 0
        %672 = vmatmul.mubr.bf16.gmra.mxu0 %v591
        %v673 = vpop.f32.mrf.mxu0
        %v674 = vadd.f32 0.0, %v673
        %v675 = vpop.f32.mrf.mxu0
        %v676 = vpop.f32.mrf.mxu0
        %v677 = vadd.f32 0.0, %v676
        %v678 = vpop.f32.mrf.mxu0
        %679 = vmatprep.mubr.bf16.mxu0 0
        %680 = vmatmul.mubr.bf16.gmra.mxu0 %v594
        %v681 = vpop.f32.mrf.mxu0
        %v682 = vadd.f32 0.0, %v681
        %v683 = vpop.f32.mrf.mxu0
        %v684 = vpop.f32.mrf.mxu0
        %v685 = vadd.f32 0.0, %v684
        %v686 = vpop.f32.mrf.mxu0
        %687 = vmatprep.mubr.bf16.mxu0 0
        %688 = vmatmul.mubr.bf16.gmra.mxu0 %v597
        %v689 = vpop.f32.mrf.mxu0
        %v690 = vadd.f32 0.0, %v689
        %v691 = vpop.f32.mrf.mxu0
        %v692 = vpop.f32.mrf.mxu0
        %v693 = vadd.f32 0.0, %v692
        %v694 = vpop.f32.mrf.mxu0
        %695 = vmatprep.mubr.bf16.mxu0 0
        %696 = vmatmul.mubr.bf16.gmra.mxu0 %v600
        %v697 = vpop.f32.mrf.mxu0
        %v698 = vadd.f32 0.0, %v697
        %v699 = vpop.f32.mrf.mxu0
        %v700 = vpop.f32.mrf.mxu0
        %v701 = vadd.f32 0.0, %v700
        %v702 = vpop.f32.mrf.mxu0
        %703 = vmatprep.mubr.bf16.mxu0 0
        %704 = vmatmul.mubr.bf16.gmra.mxu0 %v603
        %v705 = vpop.f32.mrf.mxu0
        %v706 = vadd.f32 0.0, %v705
        %v707 = vpop.f32.mrf.mxu0
        %v708 = vpop.f32.mrf.mxu0
        %v709 = vadd.f32 0.0, %v708
        %v710 = vpop.f32.mrf.mxu0
        %711 = vmatprep.mubr.bf16.mxu0 0
        %712 = vmatmul.mubr.bf16.gmra.mxu0 %v606
        %v713 = vpop.f32.mrf.mxu0
        %v714 = vadd.f32 0.0, %v713
        %v715 = vpop.f32.mrf.mxu0
        %v716 = vpop.f32.mrf.mxu0
        %v717 = vadd.f32 0.0, %v716
        %v718 = vpop.f32.mrf.mxu0
        %719 = vdwg.mxu0
        %s720 = scalar_lea.vmem %s473, 72 [#allocation2]
        %v721 = vld [vmem:[%s720] sm:$0xf]
        %v722 = vld [vmem:[%s720 + $0x4] sm:$0xf]
        %v723 = vld [vmem:[%s720 + $0x8] sm:$0xf]
        %v724 = vld [vmem:[%s720 + $0xc] sm:$0xf]
        %v725 = vld [vmem:[%s720 + $0x10] sm:$0xf]
        %v726 = vld [vmem:[%s720 + $0x14] sm:$0xf]
        %v727 = vld [vmem:[%s720 + $0x18] sm:$0xf]
        %v728 = vld [vmem:[%s720 + $0x1c] sm:$0xf]
        %v729 = vld [vmem:[%s720 + $0x20] sm:$0xf]
        %v730 = vld [vmem:[%s720 + $0x24] sm:$0xf]
        %v731 = vld [vmem:[%s720 + $0x28] sm:$0xf]
        %v732 = vld [vmem:[%s720 + $0x2c] sm:$0xf]
        %v733 = vld [vmem:[%s720 + $0x30] sm:$0xf]
        %v734 = vld [vmem:[%s720 + $0x34] sm:$0xf]
        %v735 = vld [vmem:[%s720 + $0x38] sm:$0xf]
        %v736 = vld [vmem:[%s720 + $0x3c] sm:$0xf]
        %v737 = vld [vmem:[%s720 + $0x40] sm:$0xf]
        %v738 = vld [vmem:[%s720 + $0x44] sm:$0xf]
        %v757 = vunpack.c.l.b16 %v721
        %v758 = vunpack.c.l.b16 %v722
        %v759 = vunpack.c.l.b16 %v723
        %v760 = vunpack.c.l.b16 %v724
        %v761 = vunpack.c.l.b16 %v725
        %v762 = vunpack.c.l.b16 %v726
        %v763 = vunpack.c.l.b16 %v727
        %v764 = vunpack.c.l.b16 %v728
        %v765 = vunpack.c.l.b16 %v729
        %v766 = vunpack.c.l.b16 %v730
        %v767 = vunpack.c.l.b16 %v731
        %v768 = vunpack.c.l.b16 %v732
        %v769 = vunpack.c.l.b16 %v733
        %v770 = vunpack.c.l.b16 %v734
        %v771 = vunpack.c.l.b16 %v735
        %v772 = vunpack.c.l.b16 %v736
        %v773 = vunpack.c.l.b16 %v737
        %v774 = vunpack.c.l.b16 %v738
        %v775 = vpack.c.b16 %v758, %v757
        %v776 = vpack.c.b16 %v760, %v759
        %v777 = vpack.c.b16 %v762, %v761
        %v778 = vpack.c.b16 %v764, %v763
        %v779 = vpack.c.b16 %v766, %v765
        %v780 = vpack.c.b16 %v768, %v767
        %v781 = vpack.c.b16 %v770, %v769
        %v782 = vpack.c.b16 %v772, %v771
        %v783 = vpack.c.b16 %v774, %v773
        %v785 = vsel %vm580, %v775, 0
        %v788 = vsel %vm580, %v776, 0
        %v791 = vsel %vm580, %v777, 0
        %v794 = vsel %vm580, %v778, 0
        %v797 = vsel %vm580, %v779, 0
        %v800 = vsel %vm580, %v780, 0
        %v803 = vsel %vm580, %v781, 0
        %v806 = vsel %vm580, %v782, 0
        %v809 = vsel %vm580, %v783, 0
        %811 = vmatprep.subr.bf16.mxu0 0
        %812 = vmatpush1.bf16.msra.mxu0 0
        %813 = vmatprep.subr.bf16.mxu0 0
        %814 = vmatpush1.bf16.msra.mxu0 0
        %815 = vmatprep.subr.bf16.mxu0 0
        %816 = vmatpush1.bf16.msra.mxu0 0
        %817 = vmatprep.subr.bf16.mxu0 0
        %818 = vmatpush1.bf16.msra.mxu0 0
        %819 = vmatprep.subr.bf16.mxu0 0
        %820 = vmatpush1.bf16.msra.mxu0 0
        %821 = vmatprep.subr.bf16.mxu0 0
        %822 = vmatpush1.bf16.msra.mxu0 0
        %823 = vmatprep.subr.bf16.mxu0 0
        %824 = vmatpush1.bf16.msra.mxu0 %v613
        %825 = vmatprep.subr.bf16.mxu0 0
        %826 = vmatpush1.bf16.msra.mxu0 %v577
        %827 = vmatprep.subr.bf16.mxu0 0
        %828 = vmatpush2.bf16.msra.mxu0 0
        %829 = vmatprep.subr.bf16.mxu0 0
        %830 = vmatpush2.bf16.msra.mxu0 0
        %831 = vmatprep.subr.bf16.mxu0 0
        %832 = vmatpush2.bf16.msra.mxu0 0
        %833 = vmatprep.subr.bf16.mxu0 0
        %834 = vmatpush2.bf16.msra.mxu0 0
        %835 = vmatprep.subr.bf16.mxu0 0
        %836 = vmatpush2.bf16.msra.mxu0 0
        %837 = vmatprep.subr.bf16.mxu0 0
        %838 = vmatpush2.bf16.msra.mxu0 0
        %839 = vmatprep.subr.bf16.mxu0 0
        %840 = vmatpush2.bf16.msra.mxu0 0
        %841 = vmatprep.subr.bf16.mxu0 0
        %842 = vmatpush2.bf16.msra.mxu0 0
        %843 = vmatprep.mubr.bf16.mxu0 0
        %844 = vmatmul.mubr.bf16.gmra.mxu0 %v785
        %v845 = vpop.f32.mrf.mxu0
        %v846 = vadd.f32 0.0, %v845
        %v847 = vpop.f32.mrf.mxu0
        %v848 = vpop.f32.mrf.mxu0
        %v849 = vadd.f32 0.0, %v848
        %v850 = vpop.f32.mrf.mxu0
        %851 = vmatprep.mubr.bf16.mxu0 0
        %852 = vmatmul.mubr.bf16.gmra.mxu0 %v788
        %v853 = vpop.f32.mrf.mxu0
        %v854 = vadd.f32 0.0, %v853
        %v855 = vpop.f32.mrf.mxu0
        %v856 = vpop.f32.mrf.mxu0
        %v857 = vadd.f32 0.0, %v856
        %v858 = vpop.f32.mrf.mxu0
        %859 = vmatprep.mubr.bf16.mxu0 0
        %860 = vmatmul.mubr.bf16.gmra.mxu0 %v791
        %v861 = vpop.f32.mrf.mxu0
        %v862 = vadd.f32 0.0, %v861
        %v863 = vpop.f32.mrf.mxu0
        %v864 = vpop.f32.mrf.mxu0
        %v865 = vadd.f32 0.0, %v864
        %v866 = vpop.f32.mrf.mxu0
        %867 = vmatprep.mubr.bf16.mxu0 0
        %868 = vmatmul.mubr.bf16.gmra.mxu0 %v794
        %v869 = vpop.f32.mrf.mxu0
        %v870 = vadd.f32 0.0, %v869
        %v871 = vpop.f32.mrf.mxu0
        %v872 = vpop.f32.mrf.mxu0
        %v873 = vadd.f32 0.0, %v872
        %v874 = vpop.f32.mrf.mxu0
        %875 = vmatprep.mubr.bf16.mxu0 0
        %876 = vmatmul.mubr.bf16.gmra.mxu0 %v797
        %v877 = vpop.f32.mrf.mxu0
        %v878 = vadd.f32 0.0, %v877
        %v879 = vpop.f32.mrf.mxu0
        %v880 = vpop.f32.mrf.mxu0
        %v881 = vadd.f32 0.0, %v880
        %v882 = vpop.f32.mrf.mxu0
        %883 = vmatprep.mubr.bf16.mxu0 0
        %884 = vmatmul.mubr.bf16.gmra.mxu0 %v800
        %v885 = vpop.f32.mrf.mxu0
        %v886 = vadd.f32 0.0, %v885
        %v887 = vpop.f32.mrf.mxu0
        %v888 = vpop.f32.mrf.mxu0
        %v889 = vadd.f32 0.0, %v888
        %v890 = vpop.f32.mrf.mxu0
        %891 = vmatprep.mubr.bf16.mxu0 0
        %892 = vmatmul.mubr.bf16.gmra.mxu0 %v803
        %v893 = vpop.f32.mrf.mxu0
        %v894 = vadd.f32 0.0, %v893
        %v895 = vpop.f32.mrf.mxu0
        %v896 = vpop.f32.mrf.mxu0
        %v897 = vadd.f32 0.0, %v896
        %v898 = vpop.f32.mrf.mxu0
        %899 = vmatprep.mubr.bf16.mxu0 0
        %900 = vmatmul.mubr.bf16.gmra.mxu0 %v806
        %v901 = vpop.f32.mrf.mxu0
        %v902 = vadd.f32 0.0, %v901
        %v903 = vpop.f32.mrf.mxu0
        %v904 = vpop.f32.mrf.mxu0
        %v905 = vadd.f32 0.0, %v904
        %v906 = vpop.f32.mrf.mxu0
        %907 = vmatprep.mubr.bf16.mxu0 0
        %908 = vmatmul.mubr.bf16.gmra.mxu0 %v809
        %v909 = vpop.f32.mrf.mxu0
        %v910 = vadd.f32 0.0, %v909
        %v911 = vpop.f32.mrf.mxu0
        %v912 = vpop.f32.mrf.mxu0
        %v913 = vadd.f32 0.0, %v912
        %v914 = vpop.f32.mrf.mxu0
        %915 = vdwg.mxu0
        %v916 = vmax.f32 %v650, %v846
        %v917 = vmax.f32 %v653, %v849
        %v918 = vmax.f32 %v658, %v854
        %v919 = vmax.f32 %v661, %v857
        %v920 = vmax.f32 %v666, %v862
        %v921 = vmax.f32 %v669, %v865
        %v922 = vmax.f32 %v674, %v870
        %v923 = vmax.f32 %v677, %v873
        %v924 = vmax.f32 %v682, %v878
        %v925 = vmax.f32 %v685, %v881
        %v926 = vmax.f32 %v690, %v886
        %v927 = vmax.f32 %v693, %v889
        %v928 = vmax.f32 %v698, %v894
        %v929 = vmax.f32 %v701, %v897
        %v930 = vmax.f32 %v706, %v902
        %v931 = vmax.f32 %v709, %v905
        %v932 = vmax.f32 %v714, %v910
        %v933 = vmax.f32 %v717, %v913
        %s934 = scalar_lea.vmem %s473, 144 [#allocation2]
        %v935 = vld [vmem:[%s934] sm:$0xf]
        %v936 = vld [vmem:[%s934 + $0x4] sm:$0xf]
        %v937 = vld [vmem:[%s934 + $0x8] sm:$0xf]
        %v938 = vld [vmem:[%s934 + $0xc] sm:$0xf]
        %v939 = vld [vmem:[%s934 + $0x10] sm:$0xf]
        %v940 = vld [vmem:[%s934 + $0x14] sm:$0xf]
        %v941 = vld [vmem:[%s934 + $0x18] sm:$0xf]
        %v942 = vld [vmem:[%s934 + $0x1c] sm:$0xf]
        %v943 = vld [vmem:[%s934 + $0x20] sm:$0xf]
        %v944 = vld [vmem:[%s934 + $0x24] sm:$0xf]
        %v945 = vld [vmem:[%s934 + $0x28] sm:$0xf]
        %v946 = vld [vmem:[%s934 + $0x2c] sm:$0xf]
        %v947 = vld [vmem:[%s934 + $0x30] sm:$0xf]
        %v948 = vld [vmem:[%s934 + $0x34] sm:$0xf]
        %v949 = vld [vmem:[%s934 + $0x38] sm:$0xf]
        %v950 = vld [vmem:[%s934 + $0x3c] sm:$0xf]
        %v951 = vld [vmem:[%s934 + $0x40] sm:$0xf]
        %v952 = vld [vmem:[%s934 + $0x44] sm:$0xf]
        %v971 = vunpack.c.l.b16 %v935
        %v972 = vunpack.c.l.b16 %v936
        %v973 = vunpack.c.l.b16 %v937
        %v974 = vunpack.c.l.b16 %v938
        %v975 = vunpack.c.l.b16 %v939
        %v976 = vunpack.c.l.b16 %v940
        %v977 = vunpack.c.l.b16 %v941
        %v978 = vunpack.c.l.b16 %v942
        %v979 = vunpack.c.l.b16 %v943
        %v980 = vunpack.c.l.b16 %v944
        %v981 = vunpack.c.l.b16 %v945
        %v982 = vunpack.c.l.b16 %v946
        %v983 = vunpack.c.l.b16 %v947
        %v984 = vunpack.c.l.b16 %v948
        %v985 = vunpack.c.l.b16 %v949
        %v986 = vunpack.c.l.b16 %v950
        %v987 = vunpack.c.l.b16 %v951
        %v988 = vunpack.c.l.b16 %v952
        %v989 = vpack.c.b16 %v972, %v971
        %v990 = vpack.c.b16 %v974, %v973
        %v991 = vpack.c.b16 %v976, %v975
        %v992 = vpack.c.b16 %v978, %v977
        %v993 = vpack.c.b16 %v980, %v979
        %v994 = vpack.c.b16 %v982, %v981
        %v995 = vpack.c.b16 %v984, %v983
        %v996 = vpack.c.b16 %v986, %v985
        %v997 = vpack.c.b16 %v988, %v987
        %v999 = vsel %vm580, %v989, 0
        %v1002 = vsel %vm580, %v990, 0
        %v1005 = vsel %vm580, %v991, 0
        %v1008 = vsel %vm580, %v992, 0
        %v1011 = vsel %vm580, %v993, 0
        %v1014 = vsel %vm580, %v994, 0
        %v1017 = vsel %vm580, %v995, 0
        %v1020 = vsel %vm580, %v996, 0
        %v1023 = vsel %vm580, %v997, 0
        %1025 = vmatprep.subr.bf16.mxu0 0
        %1026 = vmatpush1.bf16.msra.mxu0 0
        %1027 = vmatprep.subr.bf16.mxu0 0
        %1028 = vmatpush1.bf16.msra.mxu0 0
        %1029 = vmatprep.subr.bf16.mxu0 0
        %1030 = vmatpush1.bf16.msra.mxu0 0
        %1031 = vmatprep.subr.bf16.mxu0 0
        %1032 = vmatpush1.bf16.msra.mxu0 0
        %1033 = vmatprep.subr.bf16.mxu0 0
        %1034 = vmatpush1.bf16.msra.mxu0 0
        %1035 = vmatprep.subr.bf16.mxu0 0
        %1036 = vmatpush1.bf16.msra.mxu0 0
        %1037 = vmatprep.subr.bf16.mxu0 0
        %1038 = vmatpush1.bf16.msra.mxu0 %v613
        %1039 = vmatprep.subr.bf16.mxu0 0
        %1040 = vmatpush1.bf16.msra.mxu0 %v577
        %1041 = vmatprep.subr.bf16.mxu0 0
        %1042 = vmatpush2.bf16.msra.mxu0 0
        %1043 = vmatprep.subr.bf16.mxu0 0
        %1044 = vmatpush2.bf16.msra.mxu0 0
        %1045 = vmatprep.subr.bf16.mxu0 0
        %1046 = vmatpush2.bf16.msra.mxu0 0
        %1047 = vmatprep.subr.bf16.mxu0 0
        %1048 = vmatpush2.bf16.msra.mxu0 0
        %1049 = vmatprep.subr.bf16.mxu0 0
        %1050 = vmatpush2.bf16.msra.mxu0 0
        %1051 = vmatprep.subr.bf16.mxu0 0
        %1052 = vmatpush2.bf16.msra.mxu0 0
        %1053 = vmatprep.subr.bf16.mxu0 0
        %1054 = vmatpush2.bf16.msra.mxu0 0
        %1055 = vmatprep.subr.bf16.mxu0 0
        %1056 = vmatpush2.bf16.msra.mxu0 0
        %1057 = vmatprep.mubr.bf16.mxu0 0
        %1058 = vmatmul.mubr.bf16.gmra.mxu0 %v999
        %v1059 = vpop.f32.mrf.mxu0
        %v1060 = vadd.f32 0.0, %v1059
        %v1061 = vpop.f32.mrf.mxu0
        %v1062 = vpop.f32.mrf.mxu0
        %v1063 = vadd.f32 0.0, %v1062
        %v1064 = vpop.f32.mrf.mxu0
        %1065 = vmatprep.mubr.bf16.mxu0 0
        %1066 = vmatmul.mubr.bf16.gmra.mxu0 %v1002
        %v1067 = vpop.f32.mrf.mxu0
        %v1068 = vadd.f32 0.0, %v1067
        %v1069 = vpop.f32.mrf.mxu0
        %v1070 = vpop.f32.mrf.mxu0
        %v1071 = vadd.f32 0.0, %v1070
        %v1072 = vpop.f32.mrf.mxu0
        %1073 = vmatprep.mubr.bf16.mxu0 0
        %1074 = vmatmul.mubr.bf16.gmra.mxu0 %v1005
        %v1075 = vpop.f32.mrf.mxu0
        %v1076 = vadd.f32 0.0, %v1075
        %v1077 = vpop.f32.mrf.mxu0
        %v1078 = vpop.f32.mrf.mxu0
        %v1079 = vadd.f32 0.0, %v1078
        %v1080 = vpop.f32.mrf.mxu0
        %1081 = vmatprep.mubr.bf16.mxu0 0
        %1082 = vmatmul.mubr.bf16.gmra.mxu0 %v1008
        %v1083 = vpop.f32.mrf.mxu0
        %v1084 = vadd.f32 0.0, %v1083
        %v1085 = vpop.f32.mrf.mxu0
        %v1086 = vpop.f32.mrf.mxu0
        %v1087 = vadd.f32 0.0, %v1086
        %v1088 = vpop.f32.mrf.mxu0
        %1089 = vmatprep.mubr.bf16.mxu0 0
        %1090 = vmatmul.mubr.bf16.gmra.mxu0 %v1011
        %v1091 = vpop.f32.mrf.mxu0
        %v1092 = vadd.f32 0.0, %v1091
        %v1093 = vpop.f32.mrf.mxu0
        %v1094 = vpop.f32.mrf.mxu0
        %v1095 = vadd.f32 0.0, %v1094
        %v1096 = vpop.f32.mrf.mxu0
        %1097 = vmatprep.mubr.bf16.mxu0 0
        %1098 = vmatmul.mubr.bf16.gmra.mxu0 %v1014
        %v1099 = vpop.f32.mrf.mxu0
        %v1100 = vadd.f32 0.0, %v1099
        %v1101 = vpop.f32.mrf.mxu0
        %v1102 = vpop.f32.mrf.mxu0
        %v1103 = vadd.f32 0.0, %v1102
        %v1104 = vpop.f32.mrf.mxu0
        %1105 = vmatprep.mubr.bf16.mxu0 0
        %1106 = vmatmul.mubr.bf16.gmra.mxu0 %v1017
        %v1107 = vpop.f32.mrf.mxu0
        %v1108 = vadd.f32 0.0, %v1107
        %v1109 = vpop.f32.mrf.mxu0
        %v1110 = vpop.f32.mrf.mxu0
        %v1111 = vadd.f32 0.0, %v1110
        %v1112 = vpop.f32.mrf.mxu0
        %1113 = vmatprep.mubr.bf16.mxu0 0
        %1114 = vmatmul.mubr.bf16.gmra.mxu0 %v1020
        %v1115 = vpop.f32.mrf.mxu0
        %v1116 = vadd.f32 0.0, %v1115
        %v1117 = vpop.f32.mrf.mxu0
        %v1118 = vpop.f32.mrf.mxu0
        %v1119 = vadd.f32 0.0, %v1118
        %v1120 = vpop.f32.mrf.mxu0
        %1121 = vmatprep.mubr.bf16.mxu0 0
        %1122 = vmatmul.mubr.bf16.gmra.mxu0 %v1023
        %v1123 = vpop.f32.mrf.mxu0
        %v1124 = vadd.f32 0.0, %v1123
        %v1125 = vpop.f32.mrf.mxu0
        %v1126 = vpop.f32.mrf.mxu0
        %v1127 = vadd.f32 0.0, %v1126
        %v1128 = vpop.f32.mrf.mxu0
        %1129 = vdwg.mxu0
        %v1130 = vmax.f32 %v916, %v1060
        %v1131 = vmax.f32 %v917, %v1063
        %v1132 = vmax.f32 %v918, %v1068
        %v1133 = vmax.f32 %v919, %v1071
        %v1134 = vmax.f32 %v920, %v1076
        %v1135 = vmax.f32 %v921, %v1079
        %v1136 = vmax.f32 %v922, %v1084
        %v1137 = vmax.f32 %v923, %v1087
        %v1138 = vmax.f32 %v924, %v1092
        %v1139 = vmax.f32 %v925, %v1095
        %v1140 = vmax.f32 %v926, %v1100
        %v1141 = vmax.f32 %v927, %v1103
        %v1142 = vmax.f32 %v928, %v1108
        %v1143 = vmax.f32 %v929, %v1111
        %v1144 = vmax.f32 %v930, %v1116
        %v1145 = vmax.f32 %v931, %v1119
        %v1146 = vmax.f32 %v932, %v1124
        %v1147 = vmax.f32 %v933, %v1127
        %s1148 = scalar_lea.vmem %s473, 216 [#allocation2]
        %v1149 = vld [vmem:[%s1148] sm:$0xf]
        %v1150 = vld [vmem:[%s1148 + $0x4] sm:$0xf]
        %v1151 = vld [vmem:[%s1148 + $0x8] sm:$0xf]
        %v1152 = vld [vmem:[%s1148 + $0xc] sm:$0xf]
        %v1153 = vld [vmem:[%s1148 + $0x10] sm:$0xf]
        %v1154 = vld [vmem:[%s1148 + $0x14] sm:$0xf]
        %v1155 = vld [vmem:[%s1148 + $0x18] sm:$0xf]
        %v1156 = vld [vmem:[%s1148 + $0x1c] sm:$0xf]
        %v1157 = vld [vmem:[%s1148 + $0x20] sm:$0xf]
        %v1158 = vld [vmem:[%s1148 + $0x24] sm:$0xf]
        %v1159 = vld [vmem:[%s1148 + $0x28] sm:$0xf]
        %v1160 = vld [vmem:[%s1148 + $0x2c] sm:$0xf]
        %v1161 = vld [vmem:[%s1148 + $0x30] sm:$0xf]
        %v1162 = vld [vmem:[%s1148 + $0x34] sm:$0xf]
        %v1163 = vld [vmem:[%s1148 + $0x38] sm:$0xf]
        %v1164 = vld [vmem:[%s1148 + $0x3c] sm:$0xf]
        %v1165 = vld [vmem:[%s1148 + $0x40] sm:$0xf]
        %v1166 = vld [vmem:[%s1148 + $0x44] sm:$0xf]
        %v1185 = vunpack.c.l.b16 %v1149
        %v1186 = vunpack.c.l.b16 %v1150
        %v1187 = vunpack.c.l.b16 %v1151
        %v1188 = vunpack.c.l.b16 %v1152
        %v1189 = vunpack.c.l.b16 %v1153
        %v1190 = vunpack.c.l.b16 %v1154
        %v1191 = vunpack.c.l.b16 %v1155
        %v1192 = vunpack.c.l.b16 %v1156
        %v1193 = vunpack.c.l.b16 %v1157
        %v1194 = vunpack.c.l.b16 %v1158
        %v1195 = vunpack.c.l.b16 %v1159
        %v1196 = vunpack.c.l.b16 %v1160
        %v1197 = vunpack.c.l.b16 %v1161
        %v1198 = vunpack.c.l.b16 %v1162
        %v1199 = vunpack.c.l.b16 %v1163
        %v1200 = vunpack.c.l.b16 %v1164
        %v1201 = vunpack.c.l.b16 %v1165
        %v1202 = vunpack.c.l.b16 %v1166
        %v1203 = vpack.c.b16 %v1186, %v1185
        %v1204 = vpack.c.b16 %v1188, %v1187
        %v1205 = vpack.c.b16 %v1190, %v1189
        %v1206 = vpack.c.b16 %v1192, %v1191
        %v1207 = vpack.c.b16 %v1194, %v1193
        %v1208 = vpack.c.b16 %v1196, %v1195
        %v1209 = vpack.c.b16 %v1198, %v1197
        %v1210 = vpack.c.b16 %v1200, %v1199
        %v1211 = vpack.c.b16 %v1202, %v1201
        %v1213 = vsel %vm580, %v1203, 0
        %v1216 = vsel %vm580, %v1204, 0
        %v1219 = vsel %vm580, %v1205, 0
        %v1222 = vsel %vm580, %v1206, 0
        %v1225 = vsel %vm580, %v1207, 0
        %v1228 = vsel %vm580, %v1208, 0
        %v1231 = vsel %vm580, %v1209, 0
        %v1234 = vsel %vm580, %v1210, 0
        %v1237 = vsel %vm580, %v1211, 0
        %1239 = vmatprep.subr.bf16.mxu0 0
        %1240 = vmatpush1.bf16.msra.mxu0 0
        %1241 = vmatprep.subr.bf16.mxu0 0
        %1242 = vmatpush1.bf16.msra.mxu0 0
        %1243 = vmatprep.subr.bf16.mxu0 0
        %1244 = vmatpush1.bf16.msra.mxu0 0
        %1245 = vmatprep.subr.bf16.mxu0 0
        %1246 = vmatpush1.bf16.msra.mxu0 0
        %1247 = vmatprep.subr.bf16.mxu0 0
        %1248 = vmatpush1.bf16.msra.mxu0 0
        %1249 = vmatprep.subr.bf16.mxu0 0
        %1250 = vmatpush1.bf16.msra.mxu0 0
        %1251 = vmatprep.subr.bf16.mxu0 0
        %1252 = vmatpush1.bf16.msra.mxu0 %v613
        %1253 = vmatprep.subr.bf16.mxu0 0
        %1254 = vmatpush1.bf16.msra.mxu0 %v577
        %1255 = vmatprep.subr.bf16.mxu0 0
        %1256 = vmatpush2.bf16.msra.mxu0 0
        %1257 = vmatprep.subr.bf16.mxu0 0
        %1258 = vmatpush2.bf16.msra.mxu0 0
        %1259 = vmatprep.subr.bf16.mxu0 0
        %1260 = vmatpush2.bf16.msra.mxu0 0
        %1261 = vmatprep.subr.bf16.mxu0 0
        %1262 = vmatpush2.bf16.msra.mxu0 0
        %1263 = vmatprep.subr.bf16.mxu0 0
        %1264 = vmatpush2.bf16.msra.mxu0 0
        %1265 = vmatprep.subr.bf16.mxu0 0
        %1266 = vmatpush2.bf16.msra.mxu0 0
        %1267 = vmatprep.subr.bf16.mxu0 0
        %1268 = vmatpush2.bf16.msra.mxu0 0
        %1269 = vmatprep.subr.bf16.mxu0 0
        %1270 = vmatpush2.bf16.msra.mxu0 0
        %1271 = vmatprep.mubr.bf16.mxu0 0
        %1272 = vmatmul.mubr.bf16.gmra.mxu0 %v1213
        %v1273 = vpop.f32.mrf.mxu0
        %v1274 = vadd.f32 0.0, %v1273
        %v1275 = vpop.f32.mrf.mxu0
        %v1276 = vpop.f32.mrf.mxu0
        %v1277 = vadd.f32 0.0, %v1276
        %v1278 = vpop.f32.mrf.mxu0
        %1279 = vmatprep.mubr.bf16.mxu0 0
        %1280 = vmatmul.mubr.bf16.gmra.mxu0 %v1216
        %v1281 = vpop.f32.mrf.mxu0
        %v1282 = vadd.f32 0.0, %v1281
        %v1283 = vpop.f32.mrf.mxu0
        %v1284 = vpop.f32.mrf.mxu0
        %v1285 = vadd.f32 0.0, %v1284
        %v1286 = vpop.f32.mrf.mxu0
        %1287 = vmatprep.mubr.bf16.mxu0 0
        %1288 = vmatmul.mubr.bf16.gmra.mxu0 %v1219
        %v1289 = vpop.f32.mrf.mxu0
        %v1290 = vadd.f32 0.0, %v1289
        %v1291 = vpop.f32.mrf.mxu0
        %v1292 = vpop.f32.mrf.mxu0
        %v1293 = vadd.f32 0.0, %v1292
        %v1294 = vpop.f32.mrf.mxu0
        %1295 = vmatprep.mubr.bf16.mxu0 0
        %1296 = vmatmul.mubr.bf16.gmra.mxu0 %v1222
        %v1297 = vpop.f32.mrf.mxu0
        %v1298 = vadd.f32 0.0, %v1297
        %v1299 = vpop.f32.mrf.mxu0
        %v1300 = vpop.f32.mrf.mxu0
        %v1301 = vadd.f32 0.0, %v1300
        %v1302 = vpop.f32.mrf.mxu0
        %1303 = vmatprep.mubr.bf16.mxu0 0
        %1304 = vmatmul.mubr.bf16.gmra.mxu0 %v1225
        %v1305 = vpop.f32.mrf.mxu0
        %v1306 = vadd.f32 0.0, %v1305
        %v1307 = vpop.f32.mrf.mxu0
        %v1308 = vpop.f32.mrf.mxu0
        %v1309 = vadd.f32 0.0, %v1308
        %v1310 = vpop.f32.mrf.mxu0
        %1311 = vmatprep.mubr.bf16.mxu0 0
        %1312 = vmatmul.mubr.bf16.gmra.mxu0 %v1228
        %v1313 = vpop.f32.mrf.mxu0
        %v1314 = vadd.f32 0.0, %v1313
        %v1315 = vpop.f32.mrf.mxu0
        %v1316 = vpop.f32.mrf.mxu0
        %v1317 = vadd.f32 0.0, %v1316
        %v1318 = vpop.f32.mrf.mxu0
        %1319 = vmatprep.mubr.bf16.mxu0 0
        %1320 = vmatmul.mubr.bf16.gmra.mxu0 %v1231
        %v1321 = vpop.f32.mrf.mxu0
        %v1322 = vadd.f32 0.0, %v1321
        %v1323 = vpop.f32.mrf.mxu0
        %v1324 = vpop.f32.mrf.mxu0
        %v1325 = vadd.f32 0.0, %v1324
        %v1326 = vpop.f32.mrf.mxu0
        %1327 = vmatprep.mubr.bf16.mxu0 0
        %1328 = vmatmul.mubr.bf16.gmra.mxu0 %v1234
        %v1329 = vpop.f32.mrf.mxu0
        %v1330 = vadd.f32 0.0, %v1329
        %v1331 = vpop.f32.mrf.mxu0
        %v1332 = vpop.f32.mrf.mxu0
        %v1333 = vadd.f32 0.0, %v1332
        %v1334 = vpop.f32.mrf.mxu0
        %1335 = vmatprep.mubr.bf16.mxu0 0
        %1336 = vmatmul.mubr.bf16.gmra.mxu0 %v1237
        %v1337 = vpop.f32.mrf.mxu0
        %v1338 = vadd.f32 0.0, %v1337
        %v1339 = vpop.f32.mrf.mxu0
        %v1340 = vpop.f32.mrf.mxu0
        %v1341 = vadd.f32 0.0, %v1340
        %v1342 = vpop.f32.mrf.mxu0
        %1343 = vdwg.mxu0
        %v1344 = vmax.f32 %v1130, %v1274
        %v1345 = vmax.f32 %v1131, %v1277
        %v1346 = vmax.f32 %v1132, %v1282
        %v1347 = vmax.f32 %v1133, %v1285
        %v1348 = vmax.f32 %v1134, %v1290
        %v1349 = vmax.f32 %v1135, %v1293
        %v1350 = vmax.f32 %v1136, %v1298
        %v1351 = vmax.f32 %v1137, %v1301
        %v1352 = vmax.f32 %v1138, %v1306
        %v1353 = vmax.f32 %v1139, %v1309
        %v1354 = vmax.f32 %v1140, %v1314
        %v1355 = vmax.f32 %v1141, %v1317
        %v1356 = vmax.f32 %v1142, %v1322
        %v1357 = vmax.f32 %v1143, %v1325
        %v1358 = vmax.f32 %v1144, %v1330
        %v1359 = vmax.f32 %v1145, %v1333
        %v1360 = vmax.f32 %v1146, %v1338
        %v1361 = vmax.f32 %v1147, %v1341
        %v1362 = vld [vmem:[%s2] sm:$0x1]
        %v1364 = vlaneseq
        %v1365 = vshrl.u32 %v1364, 7
        %v1366 = vsub.s32 0, %v1365
        %v1367 = vrot.slane %v1362, %v1366
        %v1369 = vadd.f32 %v1344, %v1367
        %v1370 = vadd.f32 %v1345, %v1367
        %v1371 = vadd.f32 %v1346, %v1367
        %v1372 = vadd.f32 %v1347, %v1367
        %v1373 = vadd.f32 %v1348, %v1367
        %v1374 = vadd.f32 %v1349, %v1367
        %v1375 = vadd.f32 %v1350, %v1367
        %v1376 = vadd.f32 %v1351, %v1367
        %v1377 = vadd.f32 %v1352, %v1367
        %v1378 = vadd.f32 %v1353, %v1367
        %v1379 = vadd.f32 %v1354, %v1367
        %v1380 = vadd.f32 %v1355, %v1367
        %v1381 = vadd.f32 %v1356, %v1367
        %v1382 = vadd.f32 %v1357, %v1367
        %v1383 = vadd.f32 %v1358, %v1367
        %v1384 = vadd.f32 %v1359, %v1367
        %v1385 = vadd.f32 %v1360, %v1367
        %v1386 = vadd.f32 %v1361, %v1367
        %v1387 = vmax.f32 %v1369, 0.0
        %v1388 = vmax.f32 %v1370, 0.0
        %v1389 = vmax.f32 %v1371, 0.0
        %v1390 = vmax.f32 %v1372, 0.0
        %v1391 = vmax.f32 %v1373, 0.0
        %v1392 = vmax.f32 %v1374, 0.0
        %v1393 = vmax.f32 %v1375, 0.0
        %v1394 = vmax.f32 %v1376, 0.0
        %v1395 = vmax.f32 %v1377, 0.0
        %v1396 = vmax.f32 %v1378, 0.0
        %v1397 = vmax.f32 %v1379, 0.0
        %v1398 = vmax.f32 %v1380, 0.0
        %v1399 = vmax.f32 %v1381, 0.0
        %v1400 = vmax.f32 %v1382, 0.0
        %v1401 = vmax.f32 %v1383, 0.0
        %v1402 = vmax.f32 %v1384, 0.0
        %v1403 = vmax.f32 %v1385, 0.0
        %v1404 = vmax.f32 %v1386, 0.0
        %v1405 = vpack.c.bf16 %v1388, %v1387
        %v1406 = vpack.c.bf16 %v1390, %v1389
        %v1407 = vpack.c.bf16 %v1392, %v1391
        %v1408 = vpack.c.bf16 %v1394, %v1393
        %v1409 = vpack.c.bf16 %v1396, %v1395
        %v1410 = vpack.c.bf16 %v1398, %v1397
        %v1411 = vpack.c.bf16 %v1400, %v1399
        %v1412 = vpack.c.bf16 %v1402, %v1401
        %v1413 = vpack.c.bf16 %v1404, %v1403
        %v1423 = vunpack.c.l.b16 %v1405
        %v1424 = vunpack.c.h.b16 %v1405
        %v1425 = vunpack.c.l.b16 %v1406
        %v1426 = vunpack.c.h.b16 %v1406
        %v1427 = vunpack.c.l.b16 %v1407
        %v1428 = vunpack.c.h.b16 %v1407
        %v1429 = vunpack.c.l.b16 %v1408
        %v1430 = vunpack.c.h.b16 %v1408
        %v1431 = vunpack.c.l.b16 %v1409
        %v1432 = vunpack.c.h.b16 %v1409
        %v1433 = vunpack.c.l.b16 %v1410
        %v1434 = vunpack.c.h.b16 %v1410
        %v1435 = vunpack.c.l.b16 %v1411
        %v1436 = vunpack.c.h.b16 %v1411
        %v1437 = vunpack.c.l.b16 %v1412
        %v1438 = vunpack.c.h.b16 %v1412
        %v1439 = vunpack.c.l.b16 %v1413
        %v1440 = vunpack.c.h.b16 %v1413
        %v1441 = vpack.c.b16 %v1423, %v1423
        %v1442 = vpack.c.b16 %v1424, %v1424
        %v1443 = vpack.c.b16 %v1425, %v1425
        %v1444 = vpack.c.b16 %v1426, %v1426
        %v1445 = vpack.c.b16 %v1427, %v1427
        %v1446 = vpack.c.b16 %v1428, %v1428
        %v1447 = vpack.c.b16 %v1429, %v1429
        %v1448 = vpack.c.b16 %v1430, %v1430
        %v1449 = vpack.c.b16 %v1431, %v1431
        %v1450 = vpack.c.b16 %v1432, %v1432
        %v1451 = vpack.c.b16 %v1433, %v1433
        %v1452 = vpack.c.b16 %v1434, %v1434
        %v1453 = vpack.c.b16 %v1435, %v1435
        %v1454 = vpack.c.b16 %v1436, %v1436
        %v1455 = vpack.c.b16 %v1437, %v1437
        %v1456 = vpack.c.b16 %v1438, %v1438
        %v1457 = vpack.c.b16 %v1439, %v1439
        %v1458 = vpack.c.b16 %v1440, %v1440
        %1477 = vst [vmem:[%s499] sm:$0xf] %v1441
        %1478 = vst [vmem:[%s499 + $0x4] sm:$0xf] %v1442
        %1479 = vst [vmem:[%s499 + $0x8] sm:$0xf] %v1443
        %1480 = vst [vmem:[%s499 + $0xc] sm:$0xf] %v1444
        %1481 = vst [vmem:[%s499 + $0x10] sm:$0xf] %v1445
        %1482 = vst [vmem:[%s499 + $0x14] sm:$0xf] %v1446
        %1483 = vst [vmem:[%s499 + $0x18] sm:$0xf] %v1447
        %1484 = vst [vmem:[%s499 + $0x1c] sm:$0xf] %v1448
        %1485 = vst [vmem:[%s499 + $0x20] sm:$0xf] %v1449
        %1486 = vst [vmem:[%s499 + $0x24] sm:$0xf] %v1450
        %1487 = vst [vmem:[%s499 + $0x28] sm:$0xf] %v1451
        %1488 = vst [vmem:[%s499 + $0x2c] sm:$0xf] %v1452
        %1489 = vst [vmem:[%s499 + $0x30] sm:$0xf] %v1453
        %1490 = vst [vmem:[%s499 + $0x34] sm:$0xf] %v1454
        %1491 = vst [vmem:[%s499 + $0x38] sm:$0xf] %v1455
        %1492 = vst [vmem:[%s499 + $0x3c] sm:$0xf] %v1456
        %1493 = vst [vmem:[%s499 + $0x40] sm:$0xf] %v1457
        %1494 = vst [vmem:[%s499 + $0x44] sm:$0xf] %v1458
        %s1495 = smul.u32 18, %s14
        %p1496 = scmp.lt.s32.totalorder %s1495, 35
        %s1497 = scalar_select %p1496, %s1495, 35
        %s1498 = smul.addr %s1497, 4
        %s1499 = scalar_lea.vmem %s3, %s1498
        // Predicated region
        $region74: #{cnn_mnist_forward.3} parent=68 // pred_check
          %p1500 = pneg %p100
        $region75: #{cnn_mnist_forward.3} parent=68 // pred_check_branch
          %1502 = sbr.rel (%p1500) target = $region77
        $region76: #{cnn_mnist_forward.3} parent=68 // pred_region
          %s1503 = smul.u32 18, %s14
        $region77: #{cnn_mnist_forward.3} parent=68 // pred_fallthru
          _
      $region69: #{cnn_mnist_forward.3} parent=5 // pred_fallthru
        _
      %p1504 = scmp.le.s32.totalorder 2, %s9
      // Predicated region
      $region78: #{cnn_mnist_forward.3} parent=5 // pred_check
        %p1505 = pneg %p1504
      $region79: #{cnn_mnist_forward.3} parent=5 // pred_check_branch
        %1507 = sbr.rel (%p1505) target = $region81
      $region80: #{cnn_mnist_forward.3} parent=5 // pred_region
        %s1508 = ssub.s32 %s9, 2
        // Predicated region
        $region82: #{cnn_mnist_forward.3} parent=80 // pred_check
          %p1509 = pneg %p106
        $region83: #{cnn_mnist_forward.3} parent=80 // pred_check_branch
          %1511 = sbr.rel (%p1509) target = $region85
        $region84: #{cnn_mnist_forward.3} parent=80 // pred_region
          %s1512 = smul.u32 18, %s15
          %p1513 = scmp.lt.s32.totalorder %s1512, 35
          %s1514 = scalar_select %p1513, %s1512, 35
          %s1515 = smul.addr %s1514, 4
          %s1516 = scalar_lea.vmem %s3, %s1515
        $region85: #{cnn_mnist_forward.3} parent=80 // pred_fallthru
          _
      $region81: #{cnn_mnist_forward.3} parent=5 // pred_fallthru
        _
    $region6: #{cnn_mnist_forward.3} parent=1 // loop_footer
      %s13 = sadd.s32 1, %s9
    $region7: #{cnn_mnist_forward.3} parent=1 // loop_footer_branch
      %8 = sbr.rel target = $region3
    $region8: #{cnn_mnist_forward.3} parent=1 // loop_exit
      _

// kernel: cnn_mnist_forward.4
$region0: #{cnn_mnist_forward.4}
  #allocation0 [shape = 'u32[]', space=smem, size = 0x4, offset = 0x4, fixed_abs, tag = 'smem constant byte address 0x4 - core index']
  #allocation1 [shape = 'u32[144,128]{1,0:T(1,128)}', space=vmem, size = 0x12000, scoped, tag = 'internal scratch']
  %s0 = inlined_call_operand.vmem [shape: bf16[4,32,250], index: 0, kind: input, shape index: {}]
  %s1 = inlined_call_operand.vmem [shape: bf16[250,128], index: 1, kind: input, shape index: {}]
  %s2 = inlined_call_operand.vmem [shape: f32[1,128], index: 2, kind: input, shape index: {}]
  %s3 = inlined_call_operand.vmem [shape: bf16[32,128], index: 3, kind: output, shape index: {}]
  %s4 = sld [smem:[#allocation0]]
  $region22: #{cnn_mnist_forward.4} parent=0
    _
  %s6 = ssub.s32 1, %s4
  %s7 = scalar_select 0, %s6, %s4
  // Predicated region
  $region2: #{cnn_mnist_forward.4} parent=0 // pred_check
    _
  $region3: #{cnn_mnist_forward.4} parent=0 // pred_check_branch
    %9 = sbr.rel (0) target = $region5
  $region4: #{cnn_mnist_forward.4} parent=0 // pred_region
    _
  $region5: #{cnn_mnist_forward.4} parent=0 // pred_fallthru
    _
  // Predicated region
  $region6: #{cnn_mnist_forward.4} parent=0 // pred_check
    _
  $region7: #{cnn_mnist_forward.4} parent=0 // pred_check_branch
    %11 = sbr.rel (0) target = $region9
  $region8: #{cnn_mnist_forward.4} parent=0 // pred_region
    _
  $region9: #{cnn_mnist_forward.4} parent=0 // pred_fallthru
    _
  // Predicated region
  $region10: #{cnn_mnist_forward.4} parent=0 // pred_check
    _
  $region11: #{cnn_mnist_forward.4} parent=0 // pred_check_branch
    %13 = sbr.rel (0) target = $region13
  $region12: #{cnn_mnist_forward.4} parent=0 // pred_region
    _
  $region13: #{cnn_mnist_forward.4} parent=0 // pred_fallthru
    _
  %v15 = vld [vmem:[%s1] sm:$0xf]
  %v16 = vld [vmem:[%s1 + $0x4] sm:$0xf]
  %v17 = vld [vmem:[%s1 + $0x8] sm:$0xf]
  %v18 = vld [vmem:[%s1 + $0xc] sm:$0xf]
  %v19 = vld [vmem:[%s1 + $0x10] sm:$0xf]
  %v20 = vld [vmem:[%s1 + $0x14] sm:$0xf]
  %v21 = vld [vmem:[%s1 + $0x18] sm:$0xf]
  %v22 = vld [vmem:[%s1 + $0x1c] sm:$0xf]
  %v23 = vld [vmem:[%s1 + $0x20] sm:$0xf]
  %v24 = vld [vmem:[%s1 + $0x24] sm:$0xf]
  %v25 = vld [vmem:[%s1 + $0x28] sm:$0xf]
  %v26 = vld [vmem:[%s1 + $0x2c] sm:$0xf]
  %v27 = vld [vmem:[%s1 + $0x30] sm:$0xf]
  %v28 = vld [vmem:[%s1 + $0x34] sm:$0xf]
  %v29 = vld [vmem:[%s1 + $0x38] sm:$0xf]
  %v30 = vld [vmem:[%s1 + $0x3c] sm:$0xf]
  %v31 = vld [vmem:[%s1 + $0x40] sm:$0xf]
  %v32 = vld [vmem:[%s1 + $0x44] sm:$0xf]
  %v33 = vld [vmem:[%s1 + $0x48] sm:$0xf]
  %v34 = vld [vmem:[%s1 + $0x4c] sm:$0xf]
  %v35 = vld [vmem:[%s1 + $0x50] sm:$0xf]
  %v36 = vld [vmem:[%s1 + $0x54] sm:$0xf]
  %v37 = vld [vmem:[%s1 + $0x58] sm:$0xf]
  %v38 = vld [vmem:[%s1 + $0x5c] sm:$0xf]
  %v39 = vld [vmem:[%s1 + $0x60] sm:$0xf]
  %v40 = vld [vmem:[%s1 + $0x64] sm:$0xf]
  %v41 = vld [vmem:[%s1 + $0x68] sm:$0xf]
  %v42 = vld [vmem:[%s1 + $0x6c] sm:$0xf]
  %v43 = vld [vmem:[%s1 + $0x70] sm:$0xf]
  %v44 = vld [vmem:[%s1 + $0x74] sm:$0xf]
  %v45 = vld [vmem:[%s1 + $0x78] sm:$0xf]
  %v46 = vld [vmem:[%s1 + $0x7c] sm:$0x1]
  %v47 = vld [vmem:[%s0] sm:$0xff]
  %v48 = vld [vmem:[%s0 + $0x8] sm:$0xff]
  %v49 = vld [vmem:[%s0 + $0x10] sm:$0xff]
  %v50 = vld [vmem:[%s0 + $0x18] sm:$0xff]
  %v55 = vunpack.c.l.b16 %v47
  %v56 = vunpack.c.h.b16 %v47
  %v57 = vunpack.c.l.b16 %v48
  %v58 = vunpack.c.h.b16 %v48
  %v59 = vunpack.c.l.b16 %v49
  %v60 = vunpack.c.h.b16 %v49
  %v61 = vunpack.c.l.b16 %v50
  %v62 = vunpack.c.h.b16 %v50
  %v63 = vpack.c.b16 %v57, %v55
  %v64 = vpack.c.b16 %v58, %v56
  %v65 = vpack.c.b16 %v61, %v59
  %v66 = vpack.c.b16 %v62, %v60
  %v101 = vunpack.c.l.b16 %v15
  %v102 = vunpack.c.l.b16 %v16
  %v103 = vunpack.c.l.b16 %v17
  %v104 = vunpack.c.l.b16 %v18
  %v105 = vunpack.c.l.b16 %v19
  %v106 = vunpack.c.l.b16 %v20
  %v107 = vunpack.c.l.b16 %v21
  %v108 = vunpack.c.l.b16 %v22
  %v109 = vunpack.c.l.b16 %v23
  %v110 = vunpack.c.l.b16 %v24
  %v111 = vunpack.c.l.b16 %v25
  %v112 = vunpack.c.l.b16 %v26
  %v113 = vunpack.c.l.b16 %v27
  %v114 = vunpack.c.l.b16 %v28
  %v115 = vunpack.c.l.b16 %v29
  %v116 = vunpack.c.l.b16 %v30
  %v117 = vunpack.c.l.b16 %v31
  %v118 = vunpack.c.l.b16 %v32
  %v119 = vunpack.c.l.b16 %v33
  %v120 = vunpack.c.l.b16 %v34
  %v121 = vunpack.c.l.b16 %v35
  %v122 = vunpack.c.l.b16 %v36
  %v123 = vunpack.c.l.b16 %v37
  %v124 = vunpack.c.l.b16 %v38
  %v125 = vunpack.c.l.b16 %v39
  %v126 = vunpack.c.l.b16 %v40
  %v127 = vunpack.c.l.b16 %v41
  %v128 = vunpack.c.l.b16 %v42
  %v129 = vunpack.c.l.b16 %v43
  %v130 = vunpack.c.l.b16 %v44
  %v131 = vunpack.c.l.b16 %v45
  %v132 = vunpack.c.l.b16 %v46
  %v133 = vpack.c.b16 %v102, %v101
  %v134 = vpack.c.b16 %v104, %v103
  %v135 = vpack.c.b16 %v106, %v105
  %v136 = vpack.c.b16 %v108, %v107
  %v137 = vpack.c.b16 %v110, %v109
  %v138 = vpack.c.b16 %v112, %v111
  %v139 = vpack.c.b16 %v114, %v113
  %v140 = vpack.c.b16 %v116, %v115
  %v141 = vpack.c.b16 %v118, %v117
  %v142 = vpack.c.b16 %v120, %v119
  %v143 = vpack.c.b16 %v122, %v121
  %v144 = vpack.c.b16 %v124, %v123
  %v145 = vpack.c.b16 %v126, %v125
  %v146 = vpack.c.b16 %v128, %v127
  %v147 = vpack.c.b16 %v130, %v129
  %v148 = vpack.c.b16 %v132, %v131
  %vm164 = vcmask 998400
  %v166 = vsel %vm164, %v64, 0
  %v169 = vsel %vm164, %v66, 0
  %vm171 = vcmask 1044480
  %v173 = vsel %vm171, %v148, 0
  %175 = vmatprep.subr.bf16.mxu0 0
  %176 = vmatpush1.bf16.msra.mxu0 %v140
  %177 = vmatprep.subr.bf16.mxu0 0
  %178 = vmatpush1.bf16.msra.mxu0 %v139
  %179 = vmatprep.subr.bf16.mxu0 0
  %180 = vmatpush1.bf16.msra.mxu0 %v138
  %181 = vmatprep.subr.bf16.mxu0 0
  %182 = vmatpush1.bf16.msra.mxu0 %v137
  %183 = vmatprep.subr.bf16.mxu0 0
  %184 = vmatpush1.bf16.msra.mxu0 %v136
  %185 = vmatprep.subr.bf16.mxu0 0
  %186 = vmatpush1.bf16.msra.mxu0 %v135
  %187 = vmatprep.subr.bf16.mxu0 0
  %188 = vmatpush1.bf16.msra.mxu0 %v134
  %189 = vmatprep.subr.bf16.mxu0 0
  %190 = vmatpush1.bf16.msra.mxu0 %v133
  %191 = vmatprep.subr.bf16.mxu0 0
  %192 = vmatpush2.bf16.msra.mxu0 %v173
  %193 = vmatprep.subr.bf16.mxu0 0
  %194 = vmatpush2.bf16.msra.mxu0 %v147
  %195 = vmatprep.subr.bf16.mxu0 0
  %196 = vmatpush2.bf16.msra.mxu0 %v146
  %197 = vmatprep.subr.bf16.mxu0 0
  %198 = vmatpush2.bf16.msra.mxu0 %v145
  %199 = vmatprep.subr.bf16.mxu0 0
  %200 = vmatpush2.bf16.msra.mxu0 %v144
  %201 = vmatprep.subr.bf16.mxu0 0
  %202 = vmatpush2.bf16.msra.mxu0 %v143
  %203 = vmatprep.subr.bf16.mxu0 0
  %204 = vmatpush2.bf16.msra.mxu0 %v142
  %205 = vmatprep.subr.bf16.mxu0 0
  %206 = vmatpush2.bf16.msra.mxu0 %v141
  %207 = vmatprep.mubr.bf16.mxu0 %v166
  %208 = vmatmul.mubr.bf16.gmra.mxu0 %v63
  %v209 = vpop.f32.mrf.mxu0
  %v210 = vadd.f32 0.0, %v209
  %v211 = vpop.f32.mrf.mxu0
  %v212 = vpop.f32.mrf.mxu0
  %v213 = vadd.f32 0.0, %v212
  %v214 = vpop.f32.mrf.mxu0
  %215 = vmatprep.mubr.bf16.mxu0 %v169
  %216 = vmatmul.mubr.bf16.gmra.mxu0 %v65
  %v217 = vpop.f32.mrf.mxu0
  %v218 = vadd.f32 0.0, %v217
  %v219 = vpop.f32.mrf.mxu0
  %v220 = vpop.f32.mrf.mxu0
  %v221 = vadd.f32 0.0, %v220
  %v222 = vpop.f32.mrf.mxu0
  %223 = vdwg.mxu0
  %s224 = scalar_lea.vmem %s0, 32
  %v225 = vld [vmem:[%s224] sm:$0xff]
  %v226 = vld [vmem:[%s224 + $0x8] sm:$0xff]
  %v227 = vld [vmem:[%s224 + $0x10] sm:$0xff]
  %v228 = vld [vmem:[%s224 + $0x18] sm:$0xff]
  %v233 = vunpack.c.l.b16 %v225
  %v234 = vunpack.c.h.b16 %v225
  %v235 = vunpack.c.l.b16 %v226
  %v236 = vunpack.c.h.b16 %v226
  %v237 = vunpack.c.l.b16 %v227
  %v238 = vunpack.c.h.b16 %v227
  %v239 = vunpack.c.l.b16 %v228
  %v240 = vunpack.c.h.b16 %v228
  %v241 = vpack.c.b16 %v235, %v233
  %v242 = vpack.c.b16 %v236, %v234
  %v243 = vpack.c.b16 %v239, %v237
  %v244 = vpack.c.b16 %v240, %v238
  %v248 = vsel %vm164, %v242, 0
  %v251 = vsel %vm164, %v244, 0
  %253 = vmatprep.subr.bf16.mxu0 0
  %254 = vmatpush1.bf16.msra.mxu0 %v140
  %255 = vmatprep.subr.bf16.mxu0 0
  %256 = vmatpush1.bf16.msra.mxu0 %v139
  %257 = vmatprep.subr.bf16.mxu0 0
  %258 = vmatpush1.bf16.msra.mxu0 %v138
  %259 = vmatprep.subr.bf16.mxu0 0
  %260 = vmatpush1.bf16.msra.mxu0 %v137
  %261 = vmatprep.subr.bf16.mxu0 0
  %262 = vmatpush1.bf16.msra.mxu0 %v136
  %263 = vmatprep.subr.bf16.mxu0 0
  %264 = vmatpush1.bf16.msra.mxu0 %v135
  %265 = vmatprep.subr.bf16.mxu0 0
  %266 = vmatpush1.bf16.msra.mxu0 %v134
  %267 = vmatprep.subr.bf16.mxu0 0
  %268 = vmatpush1.bf16.msra.mxu0 %v133
  %269 = vmatprep.subr.bf16.mxu0 0
  %270 = vmatpush2.bf16.msra.mxu0 %v173
  %271 = vmatprep.subr.bf16.mxu0 0
  %272 = vmatpush2.bf16.msra.mxu0 %v147
  %273 = vmatprep.subr.bf16.mxu0 0
  %274 = vmatpush2.bf16.msra.mxu0 %v146
  %275 = vmatprep.subr.bf16.mxu0 0
  %276 = vmatpush2.bf16.msra.mxu0 %v145
  %277 = vmatprep.subr.bf16.mxu0 0
  %278 = vmatpush2.bf16.msra.mxu0 %v144
  %279 = vmatprep.subr.bf16.mxu0 0
  %280 = vmatpush2.bf16.msra.mxu0 %v143
  %281 = vmatprep.subr.bf16.mxu0 0
  %282 = vmatpush2.bf16.msra.mxu0 %v142
  %283 = vmatprep.subr.bf16.mxu0 0
  %284 = vmatpush2.bf16.msra.mxu0 %v141
  %285 = vmatprep.mubr.bf16.mxu0 %v248
  %286 = vmatmul.mubr.bf16.gmra.mxu0 %v241
  %v287 = vpop.f32.mrf.mxu0
  %v288 = vadd.f32 0.0, %v287
  %v289 = vpop.f32.mrf.mxu0
  %v290 = vpop.f32.mrf.mxu0
  %v291 = vadd.f32 0.0, %v290
  %v292 = vpop.f32.mrf.mxu0
  %293 = vmatprep.mubr.bf16.mxu0 %v251
  %294 = vmatmul.mubr.bf16.gmra.mxu0 %v243
  %v295 = vpop.f32.mrf.mxu0
  %v296 = vadd.f32 0.0, %v295
  %v297 = vpop.f32.mrf.mxu0
  %v298 = vpop.f32.mrf.mxu0
  %v299 = vadd.f32 0.0, %v298
  %v300 = vpop.f32.mrf.mxu0
  %301 = vdwg.mxu0
  %v302 = vmax.f32 %v210, %v288
  %v303 = vmax.f32 %v213, %v291
  %v304 = vmax.f32 %v218, %v296
  %v305 = vmax.f32 %v221, %v299
  %s306 = scalar_lea.vmem %s0, 64
  %v307 = vld [vmem:[%s306] sm:$0xff]
  %v308 = vld [vmem:[%s306 + $0x8] sm:$0xff]
  %v309 = vld [vmem:[%s306 + $0x10] sm:$0xff]
  %v310 = vld [vmem:[%s306 + $0x18] sm:$0xff]
  %v315 = vunpack.c.l.b16 %v307
  %v316 = vunpack.c.h.b16 %v307
  %v317 = vunpack.c.l.b16 %v308
  %v318 = vunpack.c.h.b16 %v308
  %v319 = vunpack.c.l.b16 %v309
  %v320 = vunpack.c.h.b16 %v309
  %v321 = vunpack.c.l.b16 %v310
  %v322 = vunpack.c.h.b16 %v310
  %v323 = vpack.c.b16 %v317, %v315
  %v324 = vpack.c.b16 %v318, %v316
  %v325 = vpack.c.b16 %v321, %v319
  %v326 = vpack.c.b16 %v322, %v320
  %v330 = vsel %vm164, %v324, 0
  %v333 = vsel %vm164, %v326, 0
  %335 = vmatprep.subr.bf16.mxu0 0
  %336 = vmatpush1.bf16.msra.mxu0 %v140
  %337 = vmatprep.subr.bf16.mxu0 0
  %338 = vmatpush1.bf16.msra.mxu0 %v139
  %339 = vmatprep.subr.bf16.mxu0 0
  %340 = vmatpush1.bf16.msra.mxu0 %v138
  %341 = vmatprep.subr.bf16.mxu0 0
  %342 = vmatpush1.bf16.msra.mxu0 %v137
  %343 = vmatprep.subr.bf16.mxu0 0
  %344 = vmatpush1.bf16.msra.mxu0 %v136
  %345 = vmatprep.subr.bf16.mxu0 0
  %346 = vmatpush1.bf16.msra.mxu0 %v135
  %347 = vmatprep.subr.bf16.mxu0 0
  %348 = vmatpush1.bf16.msra.mxu0 %v134
  %349 = vmatprep.subr.bf16.mxu0 0
  %350 = vmatpush1.bf16.msra.mxu0 %v133
  %351 = vmatprep.subr.bf16.mxu0 0
  %352 = vmatpush2.bf16.msra.mxu0 %v173
  %353 = vmatprep.subr.bf16.mxu0 0
  %354 = vmatpush2.bf16.msra.mxu0 %v147
  %355 = vmatprep.subr.bf16.mxu0 0
  %356 = vmatpush2.bf16.msra.mxu0 %v146
  %357 = vmatprep.subr.bf16.mxu0 0
  %358 = vmatpush2.bf16.msra.mxu0 %v145
  %359 = vmatprep.subr.bf16.mxu0 0
  %360 = vmatpush2.bf16.msra.mxu0 %v144
  %361 = vmatprep.subr.bf16.mxu0 0
  %362 = vmatpush2.bf16.msra.mxu0 %v143
  %363 = vmatprep.subr.bf16.mxu0 0
  %364 = vmatpush2.bf16.msra.mxu0 %v142
  %365 = vmatprep.subr.bf16.mxu0 0
  %366 = vmatpush2.bf16.msra.mxu0 %v141
  %367 = vmatprep.mubr.bf16.mxu0 %v330
  %368 = vmatmul.mubr.bf16.gmra.mxu0 %v323
  %v369 = vpop.f32.mrf.mxu0
  %v370 = vadd.f32 0.0, %v369
  %v371 = vpop.f32.mrf.mxu0
  %v372 = vpop.f32.mrf.mxu0
  %v373 = vadd.f32 0.0, %v372
  %v374 = vpop.f32.mrf.mxu0
  %375 = vmatprep.mubr.bf16.mxu0 %v333
  %376 = vmatmul.mubr.bf16.gmra.mxu0 %v325
  %v377 = vpop.f32.mrf.mxu0
  %v378 = vadd.f32 0.0, %v377
  %v379 = vpop.f32.mrf.mxu0
  %v380 = vpop.f32.mrf.mxu0
  %v381 = vadd.f32 0.0, %v380
  %v382 = vpop.f32.mrf.mxu0
  %383 = vdwg.mxu0
  %v384 = vmax.f32 %v302, %v370
  %v385 = vmax.f32 %v303, %v373
  %v386 = vmax.f32 %v304, %v378
  %v387 = vmax.f32 %v305, %v381
  %s388 = scalar_lea.vmem %s0, 96
  %v389 = vld [vmem:[%s388] sm:$0xff]
  %v390 = vld [vmem:[%s388 + $0x8] sm:$0xff]
  %v391 = vld [vmem:[%s388 + $0x10] sm:$0xff]
  %v392 = vld [vmem:[%s388 + $0x18] sm:$0xff]
  %v397 = vunpack.c.l.b16 %v389
  %v398 = vunpack.c.h.b16 %v389
  %v399 = vunpack.c.l.b16 %v390
  %v400 = vunpack.c.h.b16 %v390
  %v401 = vunpack.c.l.b16 %v391
  %v402 = vunpack.c.h.b16 %v391
  %v403 = vunpack.c.l.b16 %v392
  %v404 = vunpack.c.h.b16 %v392
  %v405 = vpack.c.b16 %v399, %v397
  %v406 = vpack.c.b16 %v400, %v398
  %v407 = vpack.c.b16 %v403, %v401
  %v408 = vpack.c.b16 %v404, %v402
  %v412 = vsel %vm164, %v406, 0
  %v415 = vsel %vm164, %v408, 0
  %417 = vmatprep.subr.bf16.mxu0 0
  %418 = vmatpush1.bf16.msra.mxu0 %v140
  %419 = vmatprep.subr.bf16.mxu0 0
  %420 = vmatpush1.bf16.msra.mxu0 %v139
  %421 = vmatprep.subr.bf16.mxu0 0
  %422 = vmatpush1.bf16.msra.mxu0 %v138
  %423 = vmatprep.subr.bf16.mxu0 0
  %424 = vmatpush1.bf16.msra.mxu0 %v137
  %425 = vmatprep.subr.bf16.mxu0 0
  %426 = vmatpush1.bf16.msra.mxu0 %v136
  %427 = vmatprep.subr.bf16.mxu0 0
  %428 = vmatpush1.bf16.msra.mxu0 %v135
  %429 = vmatprep.subr.bf16.mxu0 0
  %430 = vmatpush1.bf16.msra.mxu0 %v134
  %431 = vmatprep.subr.bf16.mxu0 0
  %432 = vmatpush1.bf16.msra.mxu0 %v133
  %433 = vmatprep.subr.bf16.mxu0 0
  %434 = vmatpush2.bf16.msra.mxu0 %v173
  %435 = vmatprep.subr.bf16.mxu0 0
  %436 = vmatpush2.bf16.msra.mxu0 %v147
  %437 = vmatprep.subr.bf16.mxu0 0
  %438 = vmatpush2.bf16.msra.mxu0 %v146
  %439 = vmatprep.subr.bf16.mxu0 0
  %440 = vmatpush2.bf16.msra.mxu0 %v145
  %441 = vmatprep.subr.bf16.mxu0 0
  %442 = vmatpush2.bf16.msra.mxu0 %v144
  %443 = vmatprep.subr.bf16.mxu0 0
  %444 = vmatpush2.bf16.msra.mxu0 %v143
  %445 = vmatprep.subr.bf16.mxu0 0
  %446 = vmatpush2.bf16.msra.mxu0 %v142
  %447 = vmatprep.subr.bf16.mxu0 0
  %448 = vmatpush2.bf16.msra.mxu0 %v141
  %449 = vmatprep.mubr.bf16.mxu0 %v412
  %450 = vmatmul.mubr.bf16.gmra.mxu0 %v405
  %v451 = vpop.f32.mrf.mxu0
  %v452 = vadd.f32 0.0, %v451
  %v453 = vpop.f32.mrf.mxu0
  %v454 = vpop.f32.mrf.mxu0
  %v455 = vadd.f32 0.0, %v454
  %v456 = vpop.f32.mrf.mxu0
  %457 = vmatprep.mubr.bf16.mxu0 %v415
  %458 = vmatmul.mubr.bf16.gmra.mxu0 %v407
  %v459 = vpop.f32.mrf.mxu0
  %v460 = vadd.f32 0.0, %v459
  %v461 = vpop.f32.mrf.mxu0
  %v462 = vpop.f32.mrf.mxu0
  %v463 = vadd.f32 0.0, %v462
  %v464 = vpop.f32.mrf.mxu0
  %465 = vdwg.mxu0
  %v466 = vmax.f32 %v384, %v452
  %v467 = vmax.f32 %v385, %v455
  %v468 = vmax.f32 %v386, %v460
  %v469 = vmax.f32 %v387, %v463
  %v470 = vld [vmem:[%s2] sm:$0x1]
  %v472 = vlaneseq
  %v473 = vshrl.u32 %v472, 7
  %v474 = vsub.s32 0, %v473
  %v475 = vrot.slane %v470, %v474
  %v477 = vadd.f32 %v466, %v475
  %v478 = vadd.f32 %v467, %v475
  %v479 = vadd.f32 %v468, %v475
  %v480 = vadd.f32 %v469, %v475
  %v481 = vmax.f32 %v477, 0.0
  %v482 = vmax.f32 %v478, 0.0
  %v483 = vmax.f32 %v479, 0.0
  %v484 = vmax.f32 %v480, 0.0
  %v485 = vpack.c.bf16 %v482, %v481
  %v486 = vpack.c.bf16 %v484, %v483
  %v489 = vunpack.c.l.b16 %v485
  %v490 = vunpack.c.h.b16 %v485
  %v491 = vunpack.c.l.b16 %v486
  %v492 = vunpack.c.h.b16 %v486
  %v493 = vpack.c.b16 %v489, %v489
  %v494 = vpack.c.b16 %v490, %v490
  %v495 = vpack.c.b16 %v491, %v491
  %v496 = vpack.c.b16 %v492, %v492
  %501 = vst [vmem:[%s3] sm:$0xf] %v493
  %502 = vst [vmem:[%s3 + $0x4] sm:$0xf] %v494
  %503 = vst [vmem:[%s3 + $0x8] sm:$0xf] %v495
  %504 = vst [vmem:[%s3 + $0xc] sm:$0xf] %v496
  // Predicated region
  $region14: #{cnn_mnist_forward.4} parent=0 // pred_check
    _
  $region15: #{cnn_mnist_forward.4} parent=0 // pred_check_branch
    %506 = sbr.rel (0) target = $region17
  $region16: #{cnn_mnist_forward.4} parent=0 // pred_region
    _
  $region17: #{cnn_mnist_forward.4} parent=0 // pred_fallthru
    _
  // Predicated region
  $region18: #{cnn_mnist_forward.4} parent=0 // pred_check
    _
  $region19: #{cnn_mnist_forward.4} parent=0 // pred_check_branch
    %508 = sbr.rel (0) target = $region21
  $region20: #{cnn_mnist_forward.4} parent=0 // pred_region
    _
  $region21: #{cnn_mnist_forward.4} parent=0 // pred_fallthru
    _

// kernel: cnn_mnist_forward.5
$region0: #{cnn_mnist_forward.5}
  #allocation0 [shape = 'u32[]', space=smem, size = 0x4, offset = 0x4, fixed_abs, tag = 'smem constant byte address 0x4 - core index']
  #allocation1 [shape = 'u32[144,128]{1,0:T(1,128)}', space=vmem, size = 0x12000, scoped, tag = 'internal scratch']
  %s0 = inlined_call_operand.vmem [shape: bf16[2,320], index: 0, kind: input, shape index: {}]
  %s1 = inlined_call_operand.vmem [shape: bf16[320,128], index: 1, kind: input, shape index: {}]
  %s2 = inlined_call_operand.vmem [shape: f32[1,128], index: 2, kind: input, shape index: {}]
  %s3 = inlined_call_operand.vmem [shape: bf16[128,128], index: 3, kind: input, shape index: {}]
  %s4 = inlined_call_operand.vmem [shape: f32[1,128], index: 4, kind: input, shape index: {}]
  %s5 = inlined_call_operand.hbm [shape: f32[2,128], index: 5, kind: output, shape index: {}]
  %s6 = sld [smem:[#allocation0]]
  $region30: #{cnn_mnist_forward.5} parent=0
    _
  %s8 = ssub.s32 1, %s6
  %s9 = scalar_select 0, %s8, %s6
  $region1: #{cnn_mnist_forward.5} parent=0
    #allocation2 [shape = 'u8[1024]{0}', space=vmem, size = 0x400, scoped, tag = 'output window, operand 0, single buffered']
    #allocation3 [shape = 's32[1]{0}', space=sflag, size = 0x4, scoped, tag = 'scoped memory for cnn_mnist_forward.5']
    %10 = vsyncpa [#allocation3], 0
    // Predicated region
    $region2: #{cnn_mnist_forward.5} parent=1 // pred_check
      _
    $region3: #{cnn_mnist_forward.5} parent=1 // pred_check_branch
      %12 = sbr.rel (0) target = $region5
    $region4: #{cnn_mnist_forward.5} parent=1 // pred_region
      _
    $region5: #{cnn_mnist_forward.5} parent=1 // pred_fallthru
      _
    // Predicated region
    $region6: #{cnn_mnist_forward.5} parent=1 // pred_check
      _
    $region7: #{cnn_mnist_forward.5} parent=1 // pred_check_branch
      %14 = sbr.rel (0) target = $region9
    $region8: #{cnn_mnist_forward.5} parent=1 // pred_region
      _
    $region9: #{cnn_mnist_forward.5} parent=1 // pred_fallthru
      _
    // Predicated region
    $region10: #{cnn_mnist_forward.5} parent=1 // pred_check
      _
    $region11: #{cnn_mnist_forward.5} parent=1 // pred_check_branch
      %16 = sbr.rel (0) target = $region13
    $region12: #{cnn_mnist_forward.5} parent=1 // pred_region
      _
    $region13: #{cnn_mnist_forward.5} parent=1 // pred_fallthru
      _
    // Predicated region
    $region14: #{cnn_mnist_forward.5} parent=1 // pred_check
      _
    $region15: #{cnn_mnist_forward.5} parent=1 // pred_check_branch
      %18 = sbr.rel (0) target = $region17
    $region16: #{cnn_mnist_forward.5} parent=1 // pred_region
      _
    $region17: #{cnn_mnist_forward.5} parent=1 // pred_fallthru
      _
    // Predicated region
    $region18: #{cnn_mnist_forward.5} parent=1 // pred_check
      _
    $region19: #{cnn_mnist_forward.5} parent=1 // pred_check_branch
      %20 = sbr.rel (0) target = $region21
    $region20: #{cnn_mnist_forward.5} parent=1 // pred_region
      _
    $region21: #{cnn_mnist_forward.5} parent=1 // pred_fallthru
      _
    %v22 = vld [vmem:[%s0] sm:$0x7]
    %v23 = vld [vmem:[%s1] sm:$0xf]
    %v24 = vld [vmem:[%s1 + $0x4] sm:$0xf]
    %v25 = vld [vmem:[%s1 + $0x8] sm:$0xf]
    %v26 = vld [vmem:[%s1 + $0xc] sm:$0xf]
    %v27 = vld [vmem:[%s1 + $0x10] sm:$0xf]
    %v28 = vld [vmem:[%s1 + $0x14] sm:$0xf]
    %v29 = vld [vmem:[%s1 + $0x18] sm:$0xf]
    %v30 = vld [vmem:[%s1 + $0x1c] sm:$0xf]
    %v31 = vld [vmem:[%s1 + $0x20] sm:$0xf]
    %v32 = vld [vmem:[%s1 + $0x24] sm:$0xf]
    %v33 = vld [vmem:[%s1 + $0x28] sm:$0xf]
    %v34 = vld [vmem:[%s1 + $0x2c] sm:$0xf]
    %v35 = vld [vmem:[%s1 + $0x30] sm:$0xf]
    %v36 = vld [vmem:[%s1 + $0x34] sm:$0xf]
    %v37 = vld [vmem:[%s1 + $0x38] sm:$0xf]
    %v38 = vld [vmem:[%s1 + $0x3c] sm:$0xf]
    %v39 = vld [vmem:[%s1 + $0x40] sm:$0xf]
    %v40 = vld [vmem:[%s1 + $0x44] sm:$0xf]
    %v41 = vld [vmem:[%s1 + $0x48] sm:$0xf]
    %v42 = vld [vmem:[%s1 + $0x4c] sm:$0xf]
    %v43 = vld [vmem:[%s1 + $0x50] sm:$0xf]
    %v44 = vld [vmem:[%s1 + $0x54] sm:$0xf]
    %v45 = vld [vmem:[%s1 + $0x58] sm:$0xf]
    %v46 = vld [vmem:[%s1 + $0x5c] sm:$0xf]
    %v47 = vld [vmem:[%s1 + $0x60] sm:$0xf]
    %v48 = vld [vmem:[%s1 + $0x64] sm:$0xf]
    %v49 = vld [vmem:[%s1 + $0x68] sm:$0xf]
    %v50 = vld [vmem:[%s1 + $0x6c] sm:$0xf]
    %v51 = vld [vmem:[%s1 + $0x70] sm:$0xf]
    %v52 = vld [vmem:[%s1 + $0x74] sm:$0xf]
    %v53 = vld [vmem:[%s1 + $0x78] sm:$0xf]
    %v54 = vld [vmem:[%s1 + $0x7c] sm:$0xf]
    %v55 = vld [vmem:[%s1 + $0x80] sm:$0xf]
    %v56 = vld [vmem:[%s1 + $0x84] sm:$0xf]
    %v57 = vld [vmem:[%s1 + $0x88] sm:$0xf]
    %v58 = vld [vmem:[%s1 + $0x8c] sm:$0xf]
    %v59 = vld [vmem:[%s1 + $0x90] sm:$0xf]
    %v60 = vld [vmem:[%s1 + $0x94] sm:$0xf]
    %v61 = vld [vmem:[%s1 + $0x98] sm:$0xf]
    %v62 = vld [vmem:[%s1 + $0x9c] sm:$0xf]
    %v63 = vld [vmem:[%s2] sm:$0x1]
    %v65 = vlaneseq
    %v66 = vshrl.u32 %v65, 7
    %v67 = vsub.s32 0, %v66
    %v68 = vrot.slane %v63, %v67
    %v72 = vunpack.c.l.s4 1966171168
    %v73 = vunpack.c.0.s8 %v72
    %v74 = vlaneseq
    %v75 = vshrl.u32 %v74, 7
    %v76 = vsub.s32 %v73, %v75
    %v77 = vrot.slane %v22, %v76
    %v78 = vcombine.high %v77, %v77
    %v80 = vunpack.c.l.s4 1966171168
    %v81 = vunpack.c.0.s8 %v80
    %v82 = vlaneseq
    %v83 = vshrl.u32 %v82, 7
    %v84 = vsub.s32 %v81, %v83
    %v85 = vrot.slane %v77, %v84
    %v87 = vunpack.c.l.s4 1966171168
    %v88 = vunpack.c.0.s8 %v87
    %v89 = vlaneseq
    %v90 = vshrl.u32 %v89, 7
    %v91 = vsub.s32 %v88, %v90
    %v92 = vrot.slane %v78, %v91
    %v93 = vcombine.high %v85, %v85
    %v136 = vunpack.c.l.b16 %v23
    %v137 = vunpack.c.l.b16 %v24
    %v138 = vunpack.c.l.b16 %v25
    %v139 = vunpack.c.l.b16 %v26
    %v140 = vunpack.c.l.b16 %v27
    %v141 = vunpack.c.l.b16 %v28
    %v142 = vunpack.c.l.b16 %v29
    %v143 = vunpack.c.l.b16 %v30
    %v144 = vunpack.c.l.b16 %v31
    %v145 = vunpack.c.l.b16 %v32
    %v146 = vunpack.c.l.b16 %v33
    %v147 = vunpack.c.l.b16 %v34
    %v148 = vunpack.c.l.b16 %v35
    %v149 = vunpack.c.l.b16 %v36
    %v150 = vunpack.c.l.b16 %v37
    %v151 = vunpack.c.l.b16 %v38
    %v152 = vunpack.c.l.b16 %v39
    %v153 = vunpack.c.l.b16 %v40
    %v154 = vunpack.c.l.b16 %v41
    %v155 = vunpack.c.l.b16 %v42
    %v156 = vunpack.c.l.b16 %v43
    %v157 = vunpack.c.l.b16 %v44
    %v158 = vunpack.c.l.b16 %v45
    %v159 = vunpack.c.l.b16 %v46
    %v160 = vunpack.c.l.b16 %v47
    %v161 = vunpack.c.l.b16 %v48
    %v162 = vunpack.c.l.b16 %v49
    %v163 = vunpack.c.l.b16 %v50
    %v164 = vunpack.c.l.b16 %v51
    %v165 = vunpack.c.l.b16 %v52
    %v166 = vunpack.c.l.b16 %v53
    %v167 = vunpack.c.l.b16 %v54
    %v168 = vunpack.c.l.b16 %v55
    %v169 = vunpack.c.l.b16 %v56
    %v170 = vunpack.c.l.b16 %v57
    %v171 = vunpack.c.l.b16 %v58
    %v172 = vunpack.c.l.b16 %v59
    %v173 = vunpack.c.l.b16 %v60
    %v174 = vunpack.c.l.b16 %v61
    %v175 = vunpack.c.l.b16 %v62
    %v176 = vpack.c.b16 %v137, %v136
    %v177 = vpack.c.b16 %v139, %v138
    %v178 = vpack.c.b16 %v141, %v140
    %v179 = vpack.c.b16 %v143, %v142
    %v180 = vpack.c.b16 %v145, %v144
    %v181 = vpack.c.b16 %v147, %v146
    %v182 = vpack.c.b16 %v149, %v148
    %v183 = vpack.c.b16 %v151, %v150
    %v184 = vpack.c.b16 %v153, %v152
    %v185 = vpack.c.b16 %v155, %v154
    %v186 = vpack.c.b16 %v157, %v156
    %v187 = vpack.c.b16 %v159, %v158
    %v188 = vpack.c.b16 %v161, %v160
    %v189 = vpack.c.b16 %v163, %v162
    %v190 = vpack.c.b16 %v165, %v164
    %v191 = vpack.c.b16 %v167, %v166
    %v192 = vpack.c.b16 %v169, %v168
    %v193 = vpack.c.b16 %v171, %v170
    %v194 = vpack.c.b16 %v173, %v172
    %v195 = vpack.c.b16 %v175, %v174
    %vm216 = vcmask 523264
    %v218 = vsel %vm216, %v93, 0
    %220 = vmatprep.subr.bf16.mxu0 0
    %221 = vmatpush1.bf16.msra.mxu0 %v183
    %222 = vmatprep.subr.bf16.mxu0 0
    %223 = vmatpush1.bf16.msra.mxu0 %v182
    %224 = vmatprep.subr.bf16.mxu0 0
    %225 = vmatpush1.bf16.msra.mxu0 %v181
    %226 = vmatprep.subr.bf16.mxu0 0
    %227 = vmatpush1.bf16.msra.mxu0 %v180
    %228 = vmatprep.subr.bf16.mxu0 0
    %229 = vmatpush1.bf16.msra.mxu0 %v179
    %230 = vmatprep.subr.bf16.mxu0 0
    %231 = vmatpush1.bf16.msra.mxu0 %v178
    %232 = vmatprep.subr.bf16.mxu0 0
    %233 = vmatpush1.bf16.msra.mxu0 %v177
    %234 = vmatprep.subr.bf16.mxu0 0
    %235 = vmatpush1.bf16.msra.mxu0 %v176
    %236 = vmatprep.subr.bf16.mxu0 0
    %237 = vmatpush2.bf16.msra.mxu0 %v191
    %238 = vmatprep.subr.bf16.mxu0 0
    %239 = vmatpush2.bf16.msra.mxu0 %v190
    %240 = vmatprep.subr.bf16.mxu0 0
    %241 = vmatpush2.bf16.msra.mxu0 %v189
    %242 = vmatprep.subr.bf16.mxu0 0
    %243 = vmatpush2.bf16.msra.mxu0 %v188
    %244 = vmatprep.subr.bf16.mxu0 0
    %245 = vmatpush2.bf16.msra.mxu0 %v187
    %246 = vmatprep.subr.bf16.mxu0 0
    %247 = vmatpush2.bf16.msra.mxu0 %v186
    %248 = vmatprep.subr.bf16.mxu0 0
    %249 = vmatpush2.bf16.msra.mxu0 %v185
    %250 = vmatprep.subr.bf16.mxu0 0
    %251 = vmatpush2.bf16.msra.mxu0 %v184
    %252 = vmatprep.mubr.bf16.mxu0 %v92
    %253 = vmatmul.mubr.bf16.gmra.mxu0 %v85
    %v254 = vpop.f32.mrf.mxu0
    %v255 = vadd.f32 %v68, %v254
    %v256 = vpop.f32.mrf.mxu0
    %v257 = vpop.f32.mrf.mxu0
    %v258 = vpop.f32.mrf.mxu0
    %259 = vdwg.mxu0
    %260 = vmatprep.subr.bf16.mxu0 0
    %261 = vmatpush1.bf16.msra.mxu0 0
    %262 = vmatprep.subr.bf16.mxu0 0
    %263 = vmatpush1.bf16.msra.mxu0 0
    %264 = vmatprep.subr.bf16.mxu0 0
    %265 = vmatpush1.bf16.msra.mxu0 0
    %266 = vmatprep.subr.bf16.mxu0 0
    %267 = vmatpush1.bf16.msra.mxu0 0
    %268 = vmatprep.subr.bf16.mxu0 0
    %269 = vmatpush1.bf16.msra.mxu0 %v195
    %270 = vmatprep.subr.bf16.mxu0 0
    %271 = vmatpush1.bf16.msra.mxu0 %v194
    %272 = vmatprep.subr.bf16.mxu0 0
    %273 = vmatpush1.bf16.msra.mxu0 %v193
    %274 = vmatprep.subr.bf16.mxu0 0
    %275 = vmatpush1.bf16.msra.mxu0 %v192
    %276 = vmatprep.subr.bf16.mxu0 0
    %277 = vmatpush2.bf16.msra.mxu0 0
    %278 = vmatprep.subr.bf16.mxu0 0
    %279 = vmatpush2.bf16.msra.mxu0 0
    %280 = vmatprep.subr.bf16.mxu0 0
    %281 = vmatpush2.bf16.msra.mxu0 0
    %282 = vmatprep.subr.bf16.mxu0 0
    %283 = vmatpush2.bf16.msra.mxu0 0
    %284 = vmatprep.subr.bf16.mxu0 0
    %285 = vmatpush2.bf16.msra.mxu0 0
    %286 = vmatprep.subr.bf16.mxu0 0
    %287 = vmatpush2.bf16.msra.mxu0 0
    %288 = vmatprep.subr.bf16.mxu0 0
    %289 = vmatpush2.bf16.msra.mxu0 0
    %290 = vmatprep.subr.bf16.mxu0 0
    %291 = vmatpush2.bf16.msra.mxu0 0
    %292 = vmatprep.mubr.bf16.mxu0 0
    %293 = vmatmul.mubr.bf16.gmra.mxu0 %v218
    %v294 = vpop.f32.mrf.mxu0
    %v295 = vadd.f32 %v255, %v294
    %v296 = vpop.f32.mrf.mxu0
    %v297 = vpop.f32.mrf.mxu0
    %v298 = vpop.f32.mrf.mxu0
    %299 = vdwg.mxu0
    %v300 = vmax.f32 %v295, 0.0
    %v301 = vpack.c.bf16 %v300, %v300
    %v302 = vld [vmem:[%s3] sm:$0xf]
    %v303 = vld [vmem:[%s3 + $0x4] sm:$0xf]
    %v304 = vld [vmem:[%s3 + $0x8] sm:$0xf]
    %v305 = vld [vmem:[%s3 + $0xc] sm:$0xf]
    %v306 = vld [vmem:[%s3 + $0x10] sm:$0xf]
    %v307 = vld [vmem:[%s3 + $0x14] sm:$0xf]
    %v308 = vld [vmem:[%s3 + $0x18] sm:$0xf]
    %v309 = vld [vmem:[%s3 + $0x1c] sm:$0xf]
    %v310 = vld [vmem:[%s3 + $0x20] sm:$0xf]
    %v311 = vld [vmem:[%s3 + $0x24] sm:$0xf]
    %v312 = vld [vmem:[%s3 + $0x28] sm:$0xf]
    %v313 = vld [vmem:[%s3 + $0x2c] sm:$0xf]
    %v314 = vld [vmem:[%s3 + $0x30] sm:$0xf]
    %v315 = vld [vmem:[%s3 + $0x34] sm:$0xf]
    %v316 = vld [vmem:[%s3 + $0x38] sm:$0xf]
    %v317 = vld [vmem:[%s3 + $0x3c] sm:$0xf]
    %v318 = vld [vmem:[%s4] sm:$0x1]
    %v320 = vlaneseq
    %v321 = vshrl.u32 %v320, 7
    %v322 = vsub.s32 0, %v321
    %v323 = vrot.slane %v318, %v322
    %v341 = vunpack.c.l.b16 %v302
    %v342 = vunpack.c.l.b16 %v303
    %v343 = vunpack.c.l.b16 %v304
    %v344 = vunpack.c.l.b16 %v305
    %v345 = vunpack.c.l.b16 %v306
    %v346 = vunpack.c.l.b16 %v307
    %v347 = vunpack.c.l.b16 %v308
    %v348 = vunpack.c.l.b16 %v309
    %v349 = vunpack.c.l.b16 %v310
    %v350 = vunpack.c.l.b16 %v311
    %v351 = vunpack.c.l.b16 %v312
    %v352 = vunpack.c.l.b16 %v313
    %v353 = vunpack.c.l.b16 %v314
    %v354 = vunpack.c.l.b16 %v315
    %v355 = vunpack.c.l.b16 %v316
    %v356 = vunpack.c.l.b16 %v317
    %v357 = vpack.c.b16 %v342, %v341
    %v358 = vpack.c.b16 %v344, %v343
    %v359 = vpack.c.b16 %v346, %v345
    %v360 = vpack.c.b16 %v348, %v347
    %v361 = vpack.c.b16 %v350, %v349
    %v362 = vpack.c.b16 %v352, %v351
    %v363 = vpack.c.b16 %v354, %v353
    %v364 = vpack.c.b16 %v356, %v355
    %373 = vmatprep.subr.bf16.mxu0 0
    %374 = vmatpush1.bf16.msra.mxu0 %v364
    %375 = vmatprep.subr.bf16.mxu0 0
    %376 = vmatpush1.bf16.msra.mxu0 %v363
    %377 = vmatprep.subr.bf16.mxu0 0
    %378 = vmatpush1.bf16.msra.mxu0 %v362
    %379 = vmatprep.subr.bf16.mxu0 0
    %380 = vmatpush1.bf16.msra.mxu0 %v361
    %381 = vmatprep.subr.bf16.mxu0 0
    %382 = vmatpush1.bf16.msra.mxu0 %v360
    %383 = vmatprep.subr.bf16.mxu0 0
    %384 = vmatpush1.bf16.msra.mxu0 %v359
    %385 = vmatprep.subr.bf16.mxu0 0
    %386 = vmatpush1.bf16.msra.mxu0 %v358
    %387 = vmatprep.subr.bf16.mxu0 0
    %388 = vmatpush1.bf16.msra.mxu0 %v357
    %389 = vmatprep.subr.bf16.mxu0 0
    %390 = vmatpush2.bf16.msra.mxu0 0
    %391 = vmatprep.subr.bf16.mxu0 0
    %392 = vmatpush2.bf16.msra.mxu0 0
    %393 = vmatprep.subr.bf16.mxu0 0
    %394 = vmatpush2.bf16.msra.mxu0 0
    %395 = vmatprep.subr.bf16.mxu0 0
    %396 = vmatpush2.bf16.msra.mxu0 0
    %397 = vmatprep.subr.bf16.mxu0 0
    %398 = vmatpush2.bf16.msra.mxu0 0
    %399 = vmatprep.subr.bf16.mxu0 0
    %400 = vmatpush2.bf16.msra.mxu0 0
    %401 = vmatprep.subr.bf16.mxu0 0
    %402 = vmatpush2.bf16.msra.mxu0 0
    %403 = vmatprep.subr.bf16.mxu0 0
    %404 = vmatpush2.bf16.msra.mxu0 0
    %405 = vmatprep.mubr.bf16.mxu0 0
    %406 = vmatmul.mubr.bf16.gmra.mxu0 %v301
    %v407 = vpop.f32.mrf.mxu0
    %v408 = vadd.f32 %v323, %v407
    %v409 = vpop.f32.mrf.mxu0
    %v410 = vpop.f32.mrf.mxu0
    %v411 = vpop.f32.mrf.mxu0
    %412 = vdwg.mxu0
    %v413 = vlaneseq
    %v414 = vand.u32 %v413, 127
    %vm415 = vcmp.lt.s32.totalorder %v414, 10
    %v416 = vsel %vm415, %v408, -1e+30
    %vm417 = vcmask 1041408
    %v418 = vsel %vm417, %v416, -inf
    %419 = vmax.xlane.f32.xlu0 %v418
    %v420 = vpop.xlane.xlu0 %419
    %v421 = vsub.f32 %v416, %v420
    %v422 = vmul.f32 %v421, 1.442695
    %v423 = vpow.pop %v422
    %v424 = vsel %vm417, %v423, 0.0
    %425 = vadd.xlane.f32.xlu0 %v424
    %v426 = vpop.xlane.xlu0 %425
    %v427 = vlog2.pop %v426
    %v428 = vmul.f32 %v427, 0.6931472
    %v429 = vsub.f32 %v421, %v428
    %430 = vst [vmem:[#allocation2] sm:$0x3] %v429
    // Predicated region
    $region22: #{cnn_mnist_forward.5} parent=1 // pred_check
      _
    $region23: #{cnn_mnist_forward.5} parent=1 // pred_check_branch
      %432 = sbr.rel (0) target = $region25
    $region24: #{cnn_mnist_forward.5} parent=1 // pred_region
      %s434 = ssub.s32 32, 32
      %435 = vsyncadd [#allocation3], %s434
      %s437 = sshll.u32 [#allocation2], 4
      %s438 = int_to_ptr.vmem [resolvable:$true] %s437
      %440 = dma.vmem_to_hbm [thread:$0]  %s438, 32, %s5, [#allocation3]
    $region25: #{cnn_mnist_forward.5} parent=1 // pred_fallthru
      _
    // Predicated region
    $region26: #{cnn_mnist_forward.5} parent=1 // pred_check
      _
    $region27: #{cnn_mnist_forward.5} parent=1 // pred_check_branch
      %442 = sbr.rel (0) target = $region29
    $region28: #{cnn_mnist_forward.5} parent=1 // pred_region
      %443 = dma.done [#allocation3], 32
    $region29: #{cnn_mnist_forward.5} parent=1 // pred_fallthru
      _
    %444 = vsyncpa [#allocation3], 1

</llo_original>
